<compile_context>
chip_gen: v7x
topology: tpu7x:2x2x1
jax: 0.10.0
libtpu: 0.0.40
codegen_flags: <defaults>
</compile_context>

<pallas_src>
import jax
import jax.numpy as jnp
from jax import lax
from jax.experimental import pallas as pl
from jax.experimental.pallas import tpu as pltpu


# ------------------------- chunk / VMEM budgeting --------------------------- #
def _choose_chunk_and_vmem(T, B, H, max_chunk):
    """Pick the time-chunk tc from a VMEM budget and a matching scoped limit."""
    try:
        cap = int(pltpu.get_tpu_info().vmem_capacity_bytes)
    except Exception:
        cap = 64 * 1024 * 1024
    budget = int(cap * 0.45)
    # Per-timestep VMEM, double-buffered: 2 bf16 gi chunks in + 2 f32 chunks out.
    per_row = 2 * (2 * B * 3 * H * 2) + 2 * (2 * B * H * 4)
    const = 2 * (2 * H * 6 * H * 2) + 2 * (2 * H * 4) + B * 2 * H * 4 + (1 << 20)
    tc = int(max(1, min(max_chunk, (budget - const) // max(per_row, 1), T)))
    # Prefer an exact divisor of T (no padding) if one is reasonably close.
    for d in range(tc, max(tc // 2, 1) - 1, -1):
        if T % d == 0:
            tc = d
            break
    vmem_limit = int(max(per_row * tc + const + (4 << 20), 32 << 20))
    vmem_limit = int(min(vmem_limit, cap * 7 // 10))
    vmem_limit = max(vmem_limit, 16 << 20)
    return tc, vmem_limit


# --------------------------- recurrent kernel ------------------------------- #
def _make_bigru_kernel(H, tc, pad, unroll):
    """Kernel factory (H, tc, pad baked in as Python constants).

    One grid step = one chunk of tc timesteps, both directions fused:
      gil_ref : (tc, B, 3H) bf16  forward-input projections, cols [r z n]
      gir_ref : (tc, B, 3H) bf16  reverse-input projections (read time-reversed
                                  via index_map + in-chunk reversed row)
      wbd_ref : (2H, 6H)   bf16   block-diagonal recurrent weight
                                  (cols: [r_l z_l n_l | r_r z_r n_r])
      bhn_ref : (1, 2H)    f32    n-gate hidden bias [b_hn_l | b_hn_r]
      out_f_ref / out_r_ref : (tc, B, H) f32 per-chunk outputs (rev pre-flipped)
      h_ref   : (B, 2H)    f32    carried hidden state [h_fwd | h_rev] (scratch)
    """

    def kernel(gil_ref, gir_ref, wbd_ref, bhn_ref, out_f_ref, out_r_ref, h_ref):
        c = pl.program_id(0)

        @pl.when(c == 0)
        def _():
            h_ref[...] = jnp.zeros_like(h_ref)

        B = h_ref.shape[0]
        wbd = wbd_ref[...]                                    # (2H, 6H) bf16
        bhn = bhn_ref[...].astype(jnp.float32)                # (1, 2H)
        bhn_l = jnp.broadcast_to(bhn[:, :H], (B, H))          # hoisted broadcasts
        bhn_r = jnp.broadcast_to(bhn[:, H:], (B, H))

        def step(i, carry):
            gl = gil_ref[i].astype(jnp.float32)               # (B, 3H)
            gr = gir_ref[tc - 1 - i].astype(jnp.float32)      # (B, 3H)
            h = h_ref[...]                                    # (B, 2H) f32
            # One bf16 MXU matmul covers both directions (block-diagonal W).
            gh = jnp.dot(h.astype(jnp.bfloat16), wbd,
                         preferred_element_type=jnp.float32)  # (B, 6H) f32
            # ---- forward direction (gh cols [0:3H]) ----
            r_l = jax.nn.sigmoid(gl[:, :H] + gh[:, :H])
            z_l = jax.nn.sigmoid(gl[:, H:2 * H] + gh[:, H:2 * H])
            n_l = jnp.tanh(gl[:, 2 * H:] + r_l * (gh[:, 2 * H:3 * H] + bhn_l))
            h_l = (1.0 - z_l) * n_l + z_l * h[:, :H]
            # ---- reverse direction (gh cols [3H:6H]) ----
            r_r = jax.nn.sigmoid(gr[:, :H] + gh[:, 3 * H:4 * H])
            z_r = jax.nn.sigmoid(gr[:, H:2 * H] + gh[:, 4 * H:5 * H])
            n_r = jnp.tanh(gr[:, 2 * H:] + r_r * (gh[:, 5 * H:] + bhn_r))
            h_r = (1.0 - z_r) * n_r + z_r * h[:, H:]
            if pad > 0:
                # First `pad` reverse steps consume padded rows -> hold h_rev
                # so the real (reversed) sequence starts from h_rev = 0.
                valid = (c * tc + i) >= pad
                h_r = jnp.where(valid, h_r, h[:, H:])
            h_ref[:, :H] = h_l
            h_ref[:, H:] = h_r
            out_f_ref[i] = h_l                                # forward, time s
            out_r_ref[tc - 1 - i] = h_r                       # reverse, pre-flipped
            return carry

        lax.fori_loop(0, tc, step, 0, unroll=unroll)

    return kernel


# ------------------------------ add kernel ---------------------------------- #
def _add_kernel(a_ref, b_ref, o_ref):
    o_ref[...] = a_ref[...] + b_ref[...]


# ------------------------------ host wrapper -------------------------------- #
def bidirectional_gru(x, params, *, max_time_chunk=256):
    """x: (T, B, nIn) f32.  Returns (T, B, nHidden) f32."""
    T, B, nIn = x.shape
    H = params["whh_l"].shape[1]

    # ---- pad batch to a sublane multiple (8); outputs sliced back at the end
    B_pad = -(-B // 8) * 8
    if B_pad != B:
        x = jnp.pad(x, ((0, 0), (0, B_pad - B), (0, 0)))

    # ---- VMEM-budgeted time chunk; pad T instead of degenerating to tc=1 ----
    tc, vmem_limit = _choose_chunk_and_vmem(T, B_pad, H, max_time_chunk)
    nchunks = -(-T // tc)
    T_pad = nchunks * tc
    pad = T_pad - T
    if pad:
        x = jnp.pad(x, ((0, pad), (0, 0), (0, 0)))

    # ---- Hoisted input projections: one parallel GEMM per direction --------
    # b_ih and the r/z parts of b_hh fold into the projection bias; the n-gate
    # b_hn must stay inside r * (W_hn h + b_hn) and is applied in the kernel.
    def fold_bias(bih, bhh):
        return bih + jnp.concatenate([bhh[:2 * H], jnp.zeros((H,), bih.dtype)])

    gi_l = (jnp.einsum("tbi,gi->tbg", x, params["wih_l"])
            + fold_bias(params["bih_l"], params["bhh_l"])).astype(jnp.bfloat16)
    gi_r = (jnp.einsum("tbi,gi->tbg", x, params["wih_r"])
            + fold_bias(params["bih_r"], params["bhh_r"])).astype(jnp.bfloat16)

    # ---- Block-diagonal recurrent weight (direction-major columns) ---------
    wl_t = params["whh_l"].T.astype(jnp.float32)   # (H, 3H), cols [r z n]
    wr_t = params["whh_r"].T.astype(jnp.float32)
    zblk = jnp.zeros((H, 3 * H), jnp.float32)
    wbd = jnp.concatenate(
        [jnp.concatenate([wl_t, zblk], axis=1),
         jnp.concatenate([zblk, wr_t], axis=1)], axis=0).astype(jnp.bfloat16)
    bhn = jnp.concatenate([params["bhh_l"][2 * H:],
                           params["bhh_r"][2 * H:]]).reshape(1, 2 * H)
    bhn = bhn.astype(jnp.float32)

    kernel = _make_bigru_kernel(H=H, tc=tc, pad=pad, unroll=min(tc, 8))

    # ---- Sequential recurrence: grid over time chunks, hidden in scratch ----
    grid_spec = pltpu.PrefetchScalarGridSpec(
        num_scalar_prefetch=0,
        grid=(nchunks,),
        in_specs=[
            pl.BlockSpec((tc, B_pad, 3 * H), lambda c: (c, 0, 0)),                # fwd gi
            pl.BlockSpec((tc, B_pad, 3 * H), lambda c: (nchunks - 1 - c, 0, 0)),  # rev gi
            pl.BlockSpec((2 * H, 6 * H), lambda c: (0, 0)),                       # W_bd
            pl.BlockSpec((1, 2 * H), lambda c: (0, 0)),                           # b_hn
        ],
        out_specs=[
            pl.BlockSpec((tc, B_pad, H), lambda c: (c, 0, 0)),                    # fwd out
            pl.BlockSpec((tc, B_pad, H), lambda c: (nchunks - 1 - c, 0, 0)),      # rev out (pre-flipped)
        ],
        scratch_shapes=[pltpu.VMEM((B_pad, 2 * H), jnp.float32)],                 # [h_f | h_r]
    )

    out_f, out_r = pl.pallas_call(
        kernel,
        out_shape=(jax.ShapeDtypeStruct((T_pad, B_pad, H), jnp.float32),
                   jax.ShapeDtypeStruct((T_pad, B_pad, H), jnp.float32)),
        grid_spec=grid_spec,
        compiler_params=pltpu.CompilerParams(
            dimension_semantics=("arbitrary",),   # recurrence is sequential
            vmem_limit_bytes=vmem_limit),
    )(gi_l, gi_r, wbd, bhn)

    # ---- output = fwd + rev (rev already time-aligned) ----------------------
    # Lane-dense flattened tiles, written in place over out_f.
    rows = T_pad * B_pad
    row_budget = (12 * 1024 * 1024) // (6 * H * 4)   # keep well under scoped VMEM
    row_tile = min(rows, max(8, (row_budget // 8) * 8))
    f2 = out_f.reshape(rows, H)
    r2 = out_r.reshape(rows, H)
    out2 = pl.pallas_call(
        _add_kernel,
        out_shape=jax.ShapeDtypeStruct((rows, H), jnp.float32),
        grid=(pl.cdiv(rows, row_tile),),
        in_specs=[pl.BlockSpec((row_tile, H), lambda i: (i, 0)),
                  pl.BlockSpec((row_tile, H), lambda i: (i, 0))],
        out_specs=pl.BlockSpec((row_tile, H), lambda i: (i, 0)),
        input_output_aliases={0: 0},
        compiler_params=pltpu.CompilerParams(dimension_semantics=("parallel",)),
    )(f2, r2)
    return out2.reshape(T_pad, B_pad, H)[:T, :B]


# --------------------------- parameter creation ----------------------------- #
def init_params(key, nIn, nHidden):
    """Deterministic synthetic params, PyTorch-style U(-1/sqrt(H), 1/sqrt(H))."""
    k = 1.0 / jnp.sqrt(jnp.float32(nHidden))
    names_shapes = [
        ("wih_l", (3 * nHidden, nIn)), ("whh_l", (3 * nHidden, nHidden)),
        ("bih_l", (3 * nHidden,)),     ("bhh_l", (3 * nHidden,)),
        ("wih_r", (3 * nHidden, nIn)), ("whh_r", (3 * nHidden, nHidden)),
        ("bih_r", (3 * nHidden,)),     ("bhh_r", (3 * nHidden,)),
    ]
    keys = jax.random.split(key, len(names_shapes))
    return {n: jax.random.uniform(kk, s, jnp.float32, -k, k)
            for kk, (n, s) in zip(keys, names_shapes)}


# ----------------------------- pure-JAX reference --------------------------- #
def _gru_ref(x, wih, whh, bih, bhh):
    H = whh.shape[1]

    def step(h, xt):
        gi = xt @ wih.T + bih
        gh = h @ whh.T + bhh
        i_r, i_z, i_n = gi[:, :H], gi[:, H:2 * H], gi[:, 2 * H:]
        h_r, h_z, h_n = gh[:, :H], gh[:, H:2 * H], gh[:, 2 * H:]
        r = jax.nn.sigmoid(i_r + h_r)
        z = jax.nn.sigmoid(i_z + h_z)
        n = jnp.tanh(i_n + r * h_n)
        hn = (1.0 - z) * n + z * h
        return hn, hn

    h0 = jnp.zeros((x.shape[1], H), jnp.float32)
    _, ys = jax.lax.scan(step, h0, x)
    return ys


def bidirectional_gru_ref(x, p):
    fwd = _gru_ref(x, p["wih_l"], p["whh_l"], p["bih_l"], p["bhh_l"])
    rev = _gru_ref(jnp.flip(x, axis=0),
                   p["wih_r"], p["whh_r"], p["bih_r"], p["bhh_r"])
    return fwd + jnp.flip(rev, axis=0)


# ---------------------------------- main ------------------------------------ #
if __name__ == "__main__":
    T, B, nIn, nHidden = 8, 2, 16, 32
    key = jax.random.PRNGKey(0)
    kx, kp = jax.random.split(key)
    x = jax.random.normal(kx, (T, B, nIn), jnp.float32)
    params = init_params(kp, nIn, nHidden)

    run = jax.jit(bidirectional_gru)
    out = jax.block_until_ready(run(x, params))
    ref = jax.block_until_ready(bidirectional_gru_ref(x, params))

    assert out.shape == (T, B, nHidden)
    # bf16 is used for the projection stream and the recurrent matmul operands,
    # so compare against the f32 reference with a bf16-appropriate tolerance.
    max_err = float(jnp.max(jnp.abs(out - ref)))
    assert jnp.allclose(out, ref, rtol=3e-2, atol=3e-2), \
        "mismatch vs reference; max abs err = %e" % max_err

    print("KERNEL_OK")
</pallas_src>

<mosaic_0001>
module attributes {stable_mosaic.version = 11 : i64} {
  func.func @_add_kernel(%arg0: i32, %arg1: memref<64x32xf32, #tpu.memory_space<vmem>>, %arg2: memref<64x32xf32, #tpu.memory_space<vmem>>, %arg3: memref<64x32xf32, #tpu.memory_space<vmem>>) attributes {dimension_semantics = [#tpu.dimension_semantics<parallel>], iteration_bounds = array<i64: 1>, scalar_prefetch = 0 : i64, scratch_operands = 0 : i64, tpu.core_type = #tpu.core_type<tc>, window_params = [{transform_indices = @transform_0, window_bounds = array<i64: 64, 32>}, {transform_indices = @transform_1, window_bounds = array<i64: 64, 32>}, {transform_indices = @transform_2, window_bounds = array<i64: 64, 32>}]} {
    %c0 = arith.constant 0 : index
    %c0_0 = arith.constant 0 : index
    %0 = vector.load %arg1[%c0, %c0_0] : memref<64x32xf32, #tpu.memory_space<vmem>>, vector<64x32xf32>
    %c0_1 = arith.constant 0 : index
    %c0_2 = arith.constant 0 : index
    %1 = vector.load %arg2[%c0_1, %c0_2] : memref<64x32xf32, #tpu.memory_space<vmem>>, vector<64x32xf32>
    %2 = arith.addf %0, %1 : vector<64x32xf32>
    %c0_3 = arith.constant 0 : index
    %c0_4 = arith.constant 0 : index
    %3 = vector.load %arg3[%c0_3, %c0_4] : memref<64x32xf32, #tpu.memory_space<vmem>>, vector<64x32xf32>
    tpu.vector_store %arg3[%c0_3, %c0_4], %2 {strides = array<i32>} : memref<64x32xf32, #tpu.memory_space<vmem>>, vector<64x32xf32>,
    return
  }
  func.func @transform_0(%arg0: i32) -> (i32, i32) {
    %c0_i32 = arith.constant 0 : i32
    %c0_i32_0 = arith.constant 0 : i32
    return %arg0, %c0_i32 : i32, i32
  }
  func.func @transform_1(%arg0: i32) -> (i32, i32) {
    %c0_i32 = arith.constant 0 : i32
    %c0_i32_0 = arith.constant 0 : i32
    return %arg0, %c0_i32 : i32, i32
  }
  func.func @transform_2(%arg0: i32) -> (i32, i32) {
    %c0_i32 = arith.constant 0 : i32
    %c0_i32_0 = arith.constant 0 : i32
    return %arg0, %c0_i32 : i32, i32
  }
}

module attributes {stable_mosaic.version = 11 : i64} {
  func.func @kernel(%arg0: i32, %arg1: memref<8x8x96xbf16, #tpu.memory_space<vmem>>, %arg2: memref<8x8x96xbf16, #tpu.memory_space<vmem>>, %arg3: memref<64x192xbf16, #tpu.memory_space<vmem>>, %arg4: memref<1x64xf32, #tpu.memory_space<vmem>>, %arg5: memref<8x8x32xf32, #tpu.memory_space<vmem>>, %arg6: memref<8x8x32xf32, #tpu.memory_space<vmem>>, %arg7: memref<8x64xf32, #tpu.memory_space<vmem>>) attributes {dimension_semantics = [#tpu.dimension_semantics<arbitrary>], iteration_bounds = array<i64: 1>, scalar_prefetch = 0 : i64, scratch_operands = 1 : i64, tpu.core_type = #tpu.core_type<tc>, window_params = [{transform_indices = @transform_0, window_bounds = array<i64: 8, 8, 96>}, {transform_indices = @transform_1, window_bounds = array<i64: 8, 8, 96>}, {pipeline_mode = #tpu.pipeline_mode<synchronous>, transform_indices = @transform_2, window_bounds = array<i64: 64, 192>}, {pipeline_mode = #tpu.pipeline_mode<synchronous>, transform_indices = @transform_3, window_bounds = array<i64: 1, 64>}, {transform_indices = @transform_4, window_bounds = array<i64: 8, 8, 32>}, {transform_indices = @transform_5, window_bounds = array<i64: 8, 8, 32>}]} {
    %c0_i32 = arith.constant 0 : i32
    %0 = arith.cmpi eq, %arg0, %c0_i32 : i32
    %1 = arith.extui %0 : i1 to i32
    %c0_i32_0 = arith.constant 0 : i32
    %2 = arith.cmpi ne, %1, %c0_i32_0 : i32
    scf.if %2 {
      %cst_187 = arith.constant 0.000000e+00 : f32
      %643 = vector.broadcast %cst_187 : f32 to vector<8x64xf32>
      %c0_188 = arith.constant 0 : index
      %c0_189 = arith.constant 0 : index
      %644 = vector.load %arg7[%c0_188, %c0_189] : memref<8x64xf32, #tpu.memory_space<vmem>>, vector<8x64xf32>
      tpu.vector_store %arg7[%c0_188, %c0_189], %643 {strides = array<i32>} : memref<8x64xf32, #tpu.memory_space<vmem>>, vector<8x64xf32>,
    } else {
    }
    %c0 = arith.constant 0 : index
    %c0_1 = arith.constant 0 : index
    %3 = vector.load %arg3[%c0, %c0_1] : memref<64x192xbf16, #tpu.memory_space<vmem>>, vector<64x192xbf16>
    %c0_2 = arith.constant 0 : index
    %c0_3 = arith.constant 0 : index
    %4 = vector.load %arg4[%c0_2, %c0_3] : memref<1x64xf32, #tpu.memory_space<vmem>>, vector<1x64xf32>
    %5 = vector.extract_strided_slice %4 {offsets = [0, 0], sizes = [1, 32], strides = [1, 1]} : vector<1x64xf32> to vector<1x32xf32>
    %6 = vector.shape_cast %5 : vector<1x32xf32> to vector<1x32xf32>
    %7 = vector.broadcast %6 : vector<1x32xf32> to vector<8x32xf32>
    %8 = vector.extract_strided_slice %4 {offsets = [0, 32], sizes = [1, 32], strides = [1, 1]} : vector<1x64xf32> to vector<1x32xf32>
    %9 = vector.shape_cast %8 : vector<1x32xf32> to vector<1x32xf32>
    %10 = vector.broadcast %9 : vector<1x32xf32> to vector<8x32xf32>
    %c0_i32_4 = arith.constant 0 : i32
    %11 = arith.index_cast %c0_i32_4 : i32 to index
    %c0_5 = arith.constant 0 : index
    %c0_6 = arith.constant 0 : index
    %12 = vector.load %arg1[%11, %c0_5, %c0_6] : memref<8x8x96xbf16, #tpu.memory_space<vmem>>, vector<1x8x96xbf16>
    %13 = vector.shape_cast %12 : vector<1x8x96xbf16> to vector<8x96xbf16>
    %14 = arith.extf %13 : vector<8x96xbf16> to vector<8x96xf32>
    %c7_i32 = arith.constant 7 : i32
    %15 = arith.subi %c7_i32, %c0_i32_4 : i32
    %16 = arith.index_cast %15 : i32 to index
    %c0_7 = arith.constant 0 : index
    %c0_8 = arith.constant 0 : index
    %17 = vector.load %arg2[%16, %c0_7, %c0_8] : memref<8x8x96xbf16, #tpu.memory_space<vmem>>, vector<1x8x96xbf16>
    %18 = vector.shape_cast %17 : vector<1x8x96xbf16> to vector<8x96xbf16>
    %19 = arith.extf %18 : vector<8x96xbf16> to vector<8x96xf32>
    %c0_9 = arith.constant 0 : index
    %c0_10 = arith.constant 0 : index
    %20 = vector.load %arg7[%c0_9, %c0_10] : memref<8x64xf32, #tpu.memory_space<vmem>>, vector<8x64xf32>
    %21 = arith.truncf %20 : vector<8x64xf32> to vector<8x64xbf16>
    %cst = arith.constant dense<0.000000e+00> : vector<8x192xf32>
    %22 = tpu.matmul %21, %3, %cst {dimension_numbers = #tpu.dot_dimension_numbers<[1], [0], [0], [1], [0, 0, 1, 1], [], []>} : vector<8x64xbf16>, vector<64x192xbf16>, vector<8x192xf32> -> vector<8x192xf32>
    %23 = vector.extract_strided_slice %14 {offsets = [0, 0], sizes = [8, 32], strides = [1, 1]} : vector<8x96xf32> to vector<8x32xf32>
    %24 = vector.extract_strided_slice %22 {offsets = [0, 0], sizes = [8, 32], strides = [1, 1]} : vector<8x192xf32> to vector<8x32xf32>
    %25 = arith.addf %23, %24 : vector<8x32xf32>
    %26 = arith.negf %25 : vector<8x32xf32>
    %27 = math.exp %26 : vector<8x32xf32>
    %cst_11 = arith.constant 1.000000e+00 : f32
    %28 = vector.broadcast %cst_11 : f32 to vector<8x32xf32>
    %29 = arith.addf %28, %27 : vector<8x32xf32>
    %30 = arith.divf %28, %29 : vector<8x32xf32>
    %31 = vector.extract_strided_slice %14 {offsets = [0, 32], sizes = [8, 32], strides = [1, 1]} : vector<8x96xf32> to vector<8x32xf32>
    %32 = vector.extract_strided_slice %22 {offsets = [0, 32], sizes = [8, 32], strides = [1, 1]} : vector<8x192xf32> to vector<8x32xf32>
    %33 = arith.addf %31, %32 : vector<8x32xf32>
    %34 = arith.negf %33 : vector<8x32xf32>
    %35 = math.exp %34 : vector<8x32xf32>
    %cst_12 = arith.constant 1.000000e+00 : f32
    %36 = vector.broadcast %cst_12 : f32 to vector<8x32xf32>
    %37 = arith.addf %36, %35 : vector<8x32xf32>
    %38 = arith.divf %36, %37 : vector<8x32xf32>
    %39 = vector.extract_strided_slice %14 {offsets = [0, 64], sizes = [8, 32], strides = [1, 1]} : vector<8x96xf32> to vector<8x32xf32>
    %40 = vector.extract_strided_slice %22 {offsets = [0, 64], sizes = [8, 32], strides = [1, 1]} : vector<8x192xf32> to vector<8x32xf32>
    %41 = arith.addf %40, %7 : vector<8x32xf32>
    %42 = arith.mulf %30, %41 : vector<8x32xf32>
    %43 = arith.addf %39, %42 : vector<8x32xf32>
    %44 = math.tanh %43 : vector<8x32xf32>
    %cst_13 = arith.constant 1.000000e+00 : f32
    %45 = vector.broadcast %cst_13 : f32 to vector<8x32xf32>
    %46 = arith.subf %45, %38 : vector<8x32xf32>
    %47 = arith.mulf %46, %44 : vector<8x32xf32>
    %48 = vector.extract_strided_slice %20 {offsets = [0, 0], sizes = [8, 32], strides = [1, 1]} : vector<8x64xf32> to vector<8x32xf32>
    %49 = arith.mulf %38, %48 : vector<8x32xf32>
    %50 = arith.addf %47, %49 : vector<8x32xf32>
    %51 = vector.extract_strided_slice %19 {offsets = [0, 0], sizes = [8, 32], strides = [1, 1]} : vector<8x96xf32> to vector<8x32xf32>
    %52 = vector.extract_strided_slice %22 {offsets = [0, 96], sizes = [8, 32], strides = [1, 1]} : vector<8x192xf32> to vector<8x32xf32>
    %53 = arith.addf %51, %52 : vector<8x32xf32>
    %54 = arith.negf %53 : vector<8x32xf32>
    %55 = math.exp %54 : vector<8x32xf32>
    %cst_14 = arith.constant 1.000000e+00 : f32
    %56 = vector.broadcast %cst_14 : f32 to vector<8x32xf32>
    %57 = arith.addf %56, %55 : vector<8x32xf32>
    %58 = arith.divf %56, %57 : vector<8x32xf32>
    %59 = vector.extract_strided_slice %19 {offsets = [0, 32], sizes = [8, 32], strides = [1, 1]} : vector<8x96xf32> to vector<8x32xf32>
    %60 = vector.extract_strided_slice %22 {offsets = [0, 128], sizes = [8, 32], strides = [1, 1]} : vector<8x192xf32> to vector<8x32xf32>
    %61 = arith.addf %59, %60 : vector<8x32xf32>
    %62 = arith.negf %61 : vector<8x32xf32>
    %63 = math.exp %62 : vector<8x32xf32>
    %cst_15 = arith.constant 1.000000e+00 : f32
    %64 = vector.broadcast %cst_15 : f32 to vector<8x32xf32>
    %65 = arith.addf %64, %63 : vector<8x32xf32>
    %66 = arith.divf %64, %65 : vector<8x32xf32>
    %67 = vector.extract_strided_slice %19 {offsets = [0, 64], sizes = [8, 32], strides = [1, 1]} : vector<8x96xf32> to vector<8x32xf32>
    %68 = vector.extract_strided_slice %22 {offsets = [0, 160], sizes = [8, 32], strides = [1, 1]} : vector<8x192xf32> to vector<8x32xf32>
    %69 = arith.addf %68, %10 : vector<8x32xf32>
    %70 = arith.mulf %58, %69 : vector<8x32xf32>
    %71 = arith.addf %67, %70 : vector<8x32xf32>
    %72 = math.tanh %71 : vector<8x32xf32>
    %cst_16 = arith.constant 1.000000e+00 : f32
    %73 = vector.broadcast %cst_16 : f32 to vector<8x32xf32>
    %74 = arith.subf %73, %66 : vector<8x32xf32>
    %75 = arith.mulf %74, %72 : vector<8x32xf32>
    %76 = vector.extract_strided_slice %20 {offsets = [0, 32], sizes = [8, 32], strides = [1, 1]} : vector<8x64xf32> to vector<8x32xf32>
    %77 = arith.mulf %66, %76 : vector<8x32xf32>
    %78 = arith.addf %75, %77 : vector<8x32xf32>
    %c0_17 = arith.constant 0 : index
    %c0_18 = arith.constant 0 : index
    %79 = vector.load %arg7[%c0_17, %c0_18] : memref<8x64xf32, #tpu.memory_space<vmem>>, vector<8x32xf32>
    tpu.vector_store %arg7[%c0_17, %c0_18], %50 {strides = array<i32>} : memref<8x64xf32, #tpu.memory_space<vmem>>, vector<8x32xf32>,
    %c0_19 = arith.constant 0 : index
    %c32 = arith.constant 32 : index
    %80 = vector.load %arg7[%c0_19, %c32] : memref<8x64xf32, #tpu.memory_space<vmem>>, vector<8x32xf32>
    tpu.vector_store %arg7[%c0_19, %c32], %78 {strides = array<i32>} : memref<8x64xf32, #tpu.memory_space<vmem>>, vector<8x32xf32>,
    %81 = arith.index_cast %c0_i32_4 : i32 to index
    %c0_20 = arith.constant 0 : index
    %c0_21 = arith.constant 0 : index
    %82 = vector.load %arg5[%81, %c0_20, %c0_21] : memref<8x8x32xf32, #tpu.memory_space<vmem>>, vector<1x8x32xf32>
    %83 = vector.shape_cast %82 : vector<1x8x32xf32> to vector<8x32xf32>
    %84 = vector.shape_cast %50 : vector<8x32xf32> to vector<1x8x32xf32>
    tpu.vector_store %arg5[%81, %c0_20, %c0_21], %84 {strides = array<i32>} : memref<8x8x32xf32, #tpu.memory_space<vmem>>, vector<1x8x32xf32>,
    %c7_i32_22 = arith.constant 7 : i32
    %85 = arith.subi %c7_i32_22, %c0_i32_4 : i32
    %86 = arith.index_cast %85 : i32 to index
    %c0_23 = arith.constant 0 : index
    %c0_24 = arith.constant 0 : index
    %87 = vector.load %arg6[%86, %c0_23, %c0_24] : memref<8x8x32xf32, #tpu.memory_space<vmem>>, vector<1x8x32xf32>
    %88 = vector.shape_cast %87 : vector<1x8x32xf32> to vector<8x32xf32>
    %89 = vector.shape_cast %78 : vector<8x32xf32> to vector<1x8x32xf32>
    tpu.vector_store %arg6[%86, %c0_23, %c0_24], %89 {strides = array<i32>} : memref<8x8x32xf32, #tpu.memory_space<vmem>>, vector<1x8x32xf32>,
    %c1_i32 = arith.constant 1 : i32
    %90 = arith.index_cast %c1_i32 : i32 to index
    %c0_25 = arith.constant 0 : index
    %c0_26 = arith.constant 0 : index
    %91 = vector.load %arg1[%90, %c0_25, %c0_26] : memref<8x8x96xbf16, #tpu.memory_space<vmem>>, vector<1x8x96xbf16>
    %92 = vector.shape_cast %91 : vector<1x8x96xbf16> to vector<8x96xbf16>
    %93 = arith.extf %92 : vector<8x96xbf16> to vector<8x96xf32>
    %c7_i32_27 = arith.constant 7 : i32
    %94 = arith.subi %c7_i32_27, %c1_i32 : i32
    %95 = arith.index_cast %94 : i32 to index
    %c0_28 = arith.constant 0 : index
    %c0_29 = arith.constant 0 : index
    %96 = vector.load %arg2[%95, %c0_28, %c0_29] : memref<8x8x96xbf16, #tpu.memory_space<vmem>>, vector<1x8x96xbf16>
    %97 = vector.shape_cast %96 : vector<1x8x96xbf16> to vector<8x96xbf16>
    %98 = arith.extf %97 : vector<8x96xbf16> to vector<8x96xf32>
    %c0_30 = arith.constant 0 : index
    %c0_31 = arith.constant 0 : index
    %99 = vector.load %arg7[%c0_30, %c0_31] : memref<8x64xf32, #tpu.memory_space<vmem>>, vector<8x64xf32>
    %100 = arith.truncf %99 : vector<8x64xf32> to vector<8x64xbf16>
    %cst_32 = arith.constant dense<0.000000e+00> : vector<8x192xf32>
    %101 = tpu.matmul %100, %3, %cst_32 {dimension_numbers = #tpu.dot_dimension_numbers<[1], [0], [0], [1], [0, 0, 1, 1], [], []>} : vector<8x64xbf16>, vector<64x192xbf16>, vector<8x192xf32> -> vector<8x192xf32>
    %102 = vector.extract_strided_slice %93 {offsets = [0, 0], sizes = [8, 32], strides = [1, 1]} : vector<8x96xf32> to vector<8x32xf32>
    %103 = vector.extract_strided_slice %101 {offsets = [0, 0], sizes = [8, 32], strides = [1, 1]} : vector<8x192xf32> to vector<8x32xf32>
    %104 = arith.addf %102, %103 : vector<8x32xf32>
    %105 = arith.negf %104 : vector<8x32xf32>
    %106 = math.exp %105 : vector<8x32xf32>
    %cst_33 = arith.constant 1.000000e+00 : f32
    %107 = vector.broadcast %cst_33 : f32 to vector<8x32xf32>
    %108 = arith.addf %107, %106 : vector<8x32xf32>
    %109 = arith.divf %107, %108 : vector<8x32xf32>
    %110 = vector.extract_strided_slice %93 {offsets = [0, 32], sizes = [8, 32], strides = [1, 1]} : vector<8x96xf32> to vector<8x32xf32>
    %111 = vector.extract_strided_slice %101 {offsets = [0, 32], sizes = [8, 32], strides = [1, 1]} : vector<8x192xf32> to vector<8x32xf32>
    %112 = arith.addf %110, %111 : vector<8x32xf32>
    %113 = arith.negf %112 : vector<8x32xf32>
    %114 = math.exp %113 : vector<8x32xf32>
    %cst_34 = arith.constant 1.000000e+00 : f32
    %115 = vector.broadcast %cst_34 : f32 to vector<8x32xf32>
    %116 = arith.addf %115, %114 : vector<8x32xf32>
    %117 = arith.divf %115, %116 : vector<8x32xf32>
    %118 = vector.extract_strided_slice %93 {offsets = [0, 64], sizes = [8, 32], strides = [1, 1]} : vector<8x96xf32> to vector<8x32xf32>
    %119 = vector.extract_strided_slice %101 {offsets = [0, 64], sizes = [8, 32], strides = [1, 1]} : vector<8x192xf32> to vector<8x32xf32>
    %120 = arith.addf %119, %7 : vector<8x32xf32>
    %121 = arith.mulf %109, %120 : vector<8x32xf32>
    %122 = arith.addf %118, %121 : vector<8x32xf32>
    %123 = math.tanh %122 : vector<8x32xf32>
    %cst_35 = arith.constant 1.000000e+00 : f32
    %124 = vector.broadcast %cst_35 : f32 to vector<8x32xf32>
    %125 = arith.subf %124, %117 : vector<8x32xf32>
    %126 = arith.mulf %125, %123 : vector<8x32xf32>
    %127 = vector.extract_strided_slice %99 {offsets = [0, 0], sizes = [8, 32], strides = [1, 1]} : vector<8x64xf32> to vector<8x32xf32>
    %128 = arith.mulf %117, %127 : vector<8x32xf32>
    %129 = arith.addf %126, %128 : vector<8x32xf32>
    %130 = vector.extract_strided_slice %98 {offsets = [0, 0], sizes = [8, 32], strides = [1, 1]} : vector<8x96xf32> to vector<8x32xf32>
    %131 = vector.extract_strided_slice %101 {offsets = [0, 96], sizes = [8, 32], strides = [1, 1]} : vector<8x192xf32> to vector<8x32xf32>
    %132 = arith.addf %130, %131 : vector<8x32xf32>
    %133 = arith.negf %132 : vector<8x32xf32>
    %134 = math.exp %133 : vector<8x32xf32>
    %cst_36 = arith.constant 1.000000e+00 : f32
    %135 = vector.broadcast %cst_36 : f32 to vector<8x32xf32>
    %136 = arith.addf %135, %134 : vector<8x32xf32>
    %137 = arith.divf %135, %136 : vector<8x32xf32>
    %138 = vector.extract_strided_slice %98 {offsets = [0, 32], sizes = [8, 32], strides = [1, 1]} : vector<8x96xf32> to vector<8x32xf32>
    %139 = vector.extract_strided_slice %101 {offsets = [0, 128], sizes = [8, 32], strides = [1, 1]} : vector<8x192xf32> to vector<8x32xf32>
    %140 = arith.addf %138, %139 : vector<8x32xf32>
    %141 = arith.negf %140 : vector<8x32xf32>
    %142 = math.exp %141 : vector<8x32xf32>
    %cst_37 = arith.constant 1.000000e+00 : f32
    %143 = vector.broadcast %cst_37 : f32 to vector<8x32xf32>
    %144 = arith.addf %143, %142 : vector<8x32xf32>
    %145 = arith.divf %143, %144 : vector<8x32xf32>
    %146 = vector.extract_strided_slice %98 {offsets = [0, 64], sizes = [8, 32], strides = [1, 1]} : vector<8x96xf32> to vector<8x32xf32>
    %147 = vector.extract_strided_slice %101 {offsets = [0, 160], sizes = [8, 32], strides = [1, 1]} : vector<8x192xf32> to vector<8x32xf32>
    %148 = arith.addf %147, %10 : vector<8x32xf32>
    %149 = arith.mulf %137, %148 : vector<8x32xf32>
    %150 = arith.addf %146, %149 : vector<8x32xf32>
    %151 = math.tanh %150 : vector<8x32xf32>
    %cst_38 = arith.constant 1.000000e+00 : f32
    %152 = vector.broadcast %cst_38 : f32 to vector<8x32xf32>
    %153 = arith.subf %152, %145 : vector<8x32xf32>
    %154 = arith.mulf %153, %151 : vector<8x32xf32>
    %155 = vector.extract_strided_slice %99 {offsets = [0, 32], sizes = [8, 32], strides = [1, 1]} : vector<8x64xf32> to vector<8x32xf32>
    %156 = arith.mulf %145, %155 : vector<8x32xf32>
    %157 = arith.addf %154, %156 : vector<8x32xf32>
    %c0_39 = arith.constant 0 : index
    %c0_40 = arith.constant 0 : index
    %158 = vector.load %arg7[%c0_39, %c0_40] : memref<8x64xf32, #tpu.memory_space<vmem>>, vector<8x32xf32>
    tpu.vector_store %arg7[%c0_39, %c0_40], %129 {strides = array<i32>} : memref<8x64xf32, #tpu.memory_space<vmem>>, vector<8x32xf32>,
    %c0_41 = arith.constant 0 : index
    %c32_42 = arith.constant 32 : index
    %159 = vector.load %arg7[%c0_41, %c32_42] : memref<8x64xf32, #tpu.memory_space<vmem>>, vector<8x32xf32>
    tpu.vector_store %arg7[%c0_41, %c32_42], %157 {strides = array<i32>} : memref<8x64xf32, #tpu.memory_space<vmem>>, vector<8x32xf32>,
    %160 = arith.index_cast %c1_i32 : i32 to index
    %c0_43 = arith.constant 0 : index
    %c0_44 = arith.constant 0 : index
    %161 = vector.load %arg5[%160, %c0_43, %c0_44] : memref<8x8x32xf32, #tpu.memory_space<vmem>>, vector<1x8x32xf32>
    %162 = vector.shape_cast %161 : vector<1x8x32xf32> to vector<8x32xf32>
    %163 = vector.shape_cast %129 : vector<8x32xf32> to vector<1x8x32xf32>
    tpu.vector_store %arg5[%160, %c0_43, %c0_44], %163 {strides = array<i32>} : memref<8x8x32xf32, #tpu.memory_space<vmem>>, vector<1x8x32xf32>,
    %c7_i32_45 = arith.constant 7 : i32
    %164 = arith.subi %c7_i32_45, %c1_i32 : i32
    %165 = arith.index_cast %164 : i32 to index
    %c0_46 = arith.constant 0 : index
    %c0_47 = arith.constant 0 : index
    %166 = vector.load %arg6[%165, %c0_46, %c0_47] : memref<8x8x32xf32, #tpu.memory_space<vmem>>, vector<1x8x32xf32>
    %167 = vector.shape_cast %166 : vector<1x8x32xf32> to vector<8x32xf32>
    %168 = vector.shape_cast %157 : vector<8x32xf32> to vector<1x8x32xf32>
    tpu.vector_store %arg6[%165, %c0_46, %c0_47], %168 {strides = array<i32>} : memref<8x8x32xf32, #tpu.memory_space<vmem>>, vector<1x8x32xf32>,
    %c2_i32 = arith.constant 2 : i32
    %169 = arith.index_cast %c2_i32 : i32 to index
    %c0_48 = arith.constant 0 : index
    %c0_49 = arith.constant 0 : index
    %170 = vector.load %arg1[%169, %c0_48, %c0_49] : memref<8x8x96xbf16, #tpu.memory_space<vmem>>, vector<1x8x96xbf16>
    %171 = vector.shape_cast %170 : vector<1x8x96xbf16> to vector<8x96xbf16>
    %172 = arith.extf %171 : vector<8x96xbf16> to vector<8x96xf32>
    %c7_i32_50 = arith.constant 7 : i32
    %173 = arith.subi %c7_i32_50, %c2_i32 : i32
    %174 = arith.index_cast %173 : i32 to index
    %c0_51 = arith.constant 0 : index
    %c0_52 = arith.constant 0 : index
    %175 = vector.load %arg2[%174, %c0_51, %c0_52] : memref<8x8x96xbf16, #tpu.memory_space<vmem>>, vector<1x8x96xbf16>
    %176 = vector.shape_cast %175 : vector<1x8x96xbf16> to vector<8x96xbf16>
    %177 = arith.extf %176 : vector<8x96xbf16> to vector<8x96xf32>
    %c0_53 = arith.constant 0 : index
    %c0_54 = arith.constant 0 : index
    %178 = vector.load %arg7[%c0_53, %c0_54] : memref<8x64xf32, #tpu.memory_space<vmem>>, vector<8x64xf32>
    %179 = arith.truncf %178 : vector<8x64xf32> to vector<8x64xbf16>
    %cst_55 = arith.constant dense<0.000000e+00> : vector<8x192xf32>
    %180 = tpu.matmul %179, %3, %cst_55 {dimension_numbers = #tpu.dot_dimension_numbers<[1], [0], [0], [1], [0, 0, 1, 1], [], []>} : vector<8x64xbf16>, vector<64x192xbf16>, vector<8x192xf32> -> vector<8x192xf32>
    %181 = vector.extract_strided_slice %172 {offsets = [0, 0], sizes = [8, 32], strides = [1, 1]} : vector<8x96xf32> to vector<8x32xf32>
    %182 = vector.extract_strided_slice %180 {offsets = [0, 0], sizes = [8, 32], strides = [1, 1]} : vector<8x192xf32> to vector<8x32xf32>
    %183 = arith.addf %181, %182 : vector<8x32xf32>
    %184 = arith.negf %183 : vector<8x32xf32>
    %185 = math.exp %184 : vector<8x32xf32>
    %cst_56 = arith.constant 1.000000e+00 : f32
    %186 = vector.broadcast %cst_56 : f32 to vector<8x32xf32>
    %187 = arith.addf %186, %185 : vector<8x32xf32>
    %188 = arith.divf %186, %187 : vector<8x32xf32>
    %189 = vector.extract_strided_slice %172 {offsets = [0, 32], sizes = [8, 32], strides = [1, 1]} : vector<8x96xf32> to vector<8x32xf32>
    %190 = vector.extract_strided_slice %180 {offsets = [0, 32], sizes = [8, 32], strides = [1, 1]} : vector<8x192xf32> to vector<8x32xf32>
    %191 = arith.addf %189, %190 : vector<8x32xf32>
    %192 = arith.negf %191 : vector<8x32xf32>
    %193 = math.exp %192 : vector<8x32xf32>
    %cst_57 = arith.constant 1.000000e+00 : f32
    %194 = vector.broadcast %cst_57 : f32 to vector<8x32xf32>
    %195 = arith.addf %194, %193 : vector<8x32xf32>
    %196 = arith.divf %194, %195 : vector<8x32xf32>
    %197 = vector.extract_strided_slice %172 {offsets = [0, 64], sizes = [8, 32], strides = [1, 1]} : vector<8x96xf32> to vector<8x32xf32>
    %198 = vector.extract_strided_slice %180 {offsets = [0, 64], sizes = [8, 32], strides = [1, 1]} : vector<8x192xf32> to vector<8x32xf32>
    %199 = arith.addf %198, %7 : vector<8x32xf32>
    %200 = arith.mulf %188, %199 : vector<8x32xf32>
    %201 = arith.addf %197, %200 : vector<8x32xf32>
    %202 = math.tanh %201 : vector<8x32xf32>
    %cst_58 = arith.constant 1.000000e+00 : f32
    %203 = vector.broadcast %cst_58 : f32 to vector<8x32xf32>
    %204 = arith.subf %203, %196 : vector<8x32xf32>
    %205 = arith.mulf %204, %202 : vector<8x32xf32>
    %206 = vector.extract_strided_slice %178 {offsets = [0, 0], sizes = [8, 32], strides = [1, 1]} : vector<8x64xf32> to vector<8x32xf32>
    %207 = arith.mulf %196, %206 : vector<8x32xf32>
    %208 = arith.addf %205, %207 : vector<8x32xf32>
    %209 = vector.extract_strided_slice %177 {offsets = [0, 0], sizes = [8, 32], strides = [1, 1]} : vector<8x96xf32> to vector<8x32xf32>
    %210 = vector.extract_strided_slice %180 {offsets = [0, 96], sizes = [8, 32], strides = [1, 1]} : vector<8x192xf32> to vector<8x32xf32>
    %211 = arith.addf %209, %210 : vector<8x32xf32>
    %212 = arith.negf %211 : vector<8x32xf32>
    %213 = math.exp %212 : vector<8x32xf32>
    %cst_59 = arith.constant 1.000000e+00 : f32
    %214 = vector.broadcast %cst_59 : f32 to vector<8x32xf32>
    %215 = arith.addf %214, %213 : vector<8x32xf32>
    %216 = arith.divf %214, %215 : vector<8x32xf32>
    %217 = vector.extract_strided_slice %177 {offsets = [0, 32], sizes = [8, 32], strides = [1, 1]} : vector<8x96xf32> to vector<8x32xf32>
    %218 = vector.extract_strided_slice %180 {offsets = [0, 128], sizes = [8, 32], strides = [1, 1]} : vector<8x192xf32> to vector<8x32xf32>
    %219 = arith.addf %217, %218 : vector<8x32xf32>
    %220 = arith.negf %219 : vector<8x32xf32>
    %221 = math.exp %220 : vector<8x32xf32>
    %cst_60 = arith.constant 1.000000e+00 : f32
    %222 = vector.broadcast %cst_60 : f32 to vector<8x32xf32>
    %223 = arith.addf %222, %221 : vector<8x32xf32>
    %224 = arith.divf %222, %223 : vector<8x32xf32>
    %225 = vector.extract_strided_slice %177 {offsets = [0, 64], sizes = [8, 32], strides = [1, 1]} : vector<8x96xf32> to vector<8x32xf32>
    %226 = vector.extract_strided_slice %180 {offsets = [0, 160], sizes = [8, 32], strides = [1, 1]} : vector<8x192xf32> to vector<8x32xf32>
    %227 = arith.addf %226, %10 : vector<8x32xf32>
    %228 = arith.mulf %216, %227 : vector<8x32xf32>
    %229 = arith.addf %225, %228 : vector<8x32xf32>
    %230 = math.tanh %229 : vector<8x32xf32>
    %cst_61 = arith.constant 1.000000e+00 : f32
    %231 = vector.broadcast %cst_61 : f32 to vector<8x32xf32>
    %232 = arith.subf %231, %224 : vector<8x32xf32>
    %233 = arith.mulf %232, %230 : vector<8x32xf32>
    %234 = vector.extract_strided_slice %178 {offsets = [0, 32], sizes = [8, 32], strides = [1, 1]} : vector<8x64xf32> to vector<8x32xf32>
    %235 = arith.mulf %224, %234 : vector<8x32xf32>
    %236 = arith.addf %233, %235 : vector<8x32xf32>
    %c0_62 = arith.constant 0 : index
    %c0_63 = arith.constant 0 : index
    %237 = vector.load %arg7[%c0_62, %c0_63] : memref<8x64xf32, #tpu.memory_space<vmem>>, vector<8x32xf32>
    tpu.vector_store %arg7[%c0_62, %c0_63], %208 {strides = array<i32>} : memref<8x64xf32, #tpu.memory_space<vmem>>, vector<8x32xf32>,
    %c0_64 = arith.constant 0 : index
    %c32_65 = arith.constant 32 : index
    %238 = vector.load %arg7[%c0_64, %c32_65] : memref<8x64xf32, #tpu.memory_space<vmem>>, vector<8x32xf32>
    tpu.vector_store %arg7[%c0_64, %c32_65], %236 {strides = array<i32>} : memref<8x64xf32, #tpu.memory_space<vmem>>, vector<8x32xf32>,
    %239 = arith.index_cast %c2_i32 : i32 to index
    %c0_66 = arith.constant 0 : index
    %c0_67 = arith.constant 0 : index
    %240 = vector.load %arg5[%239, %c0_66, %c0_67] : memref<8x8x32xf32, #tpu.memory_space<vmem>>, vector<1x8x32xf32>
    %241 = vector.shape_cast %240 : vector<1x8x32xf32> to vector<8x32xf32>
    %242 = vector.shape_cast %208 : vector<8x32xf32> to vector<1x8x32xf32>
    tpu.vector_store %arg5[%239, %c0_66, %c0_67], %242 {strides = array<i32>} : memref<8x8x32xf32, #tpu.memory_space<vmem>>, vector<1x8x32xf32>,
    %c7_i32_68 = arith.constant 7 : i32
    %243 = arith.subi %c7_i32_68, %c2_i32 : i32
    %244 = arith.index_cast %243 : i32 to index
    %c0_69 = arith.constant 0 : index
    %c0_70 = arith.constant 0 : index
    %245 = vector.load %arg6[%244, %c0_69, %c0_70] : memref<8x8x32xf32, #tpu.memory_space<vmem>>, vector<1x8x32xf32>
    %246 = vector.shape_cast %245 : vector<1x8x32xf32> to vector<8x32xf32>
    %247 = vector.shape_cast %236 : vector<8x32xf32> to vector<1x8x32xf32>
    tpu.vector_store %arg6[%244, %c0_69, %c0_70], %247 {strides = array<i32>} : memref<8x8x32xf32, #tpu.memory_space<vmem>>, vector<1x8x32xf32>,
    %c3_i32 = arith.constant 3 : i32
    %248 = arith.index_cast %c3_i32 : i32 to index
    %c0_71 = arith.constant 0 : index
    %c0_72 = arith.constant 0 : index
    %249 = vector.load %arg1[%248, %c0_71, %c0_72] : memref<8x8x96xbf16, #tpu.memory_space<vmem>>, vector<1x8x96xbf16>
    %250 = vector.shape_cast %249 : vector<1x8x96xbf16> to vector<8x96xbf16>
    %251 = arith.extf %250 : vector<8x96xbf16> to vector<8x96xf32>
    %c7_i32_73 = arith.constant 7 : i32
    %252 = arith.subi %c7_i32_73, %c3_i32 : i32
    %253 = arith.index_cast %252 : i32 to index
    %c0_74 = arith.constant 0 : index
    %c0_75 = arith.constant 0 : index
    %254 = vector.load %arg2[%253, %c0_74, %c0_75] : memref<8x8x96xbf16, #tpu.memory_space<vmem>>, vector<1x8x96xbf16>
    %255 = vector.shape_cast %254 : vector<1x8x96xbf16> to vector<8x96xbf16>
    %256 = arith.extf %255 : vector<8x96xbf16> to vector<8x96xf32>
    %c0_76 = arith.constant 0 : index
    %c0_77 = arith.constant 0 : index
    %257 = vector.load %arg7[%c0_76, %c0_77] : memref<8x64xf32, #tpu.memory_space<vmem>>, vector<8x64xf32>
    %258 = arith.truncf %257 : vector<8x64xf32> to vector<8x64xbf16>
    %cst_78 = arith.constant dense<0.000000e+00> : vector<8x192xf32>
    %259 = tpu.matmul %258, %3, %cst_78 {dimension_numbers = #tpu.dot_dimension_numbers<[1], [0], [0], [1], [0, 0, 1, 1], [], []>} : vector<8x64xbf16>, vector<64x192xbf16>, vector<8x192xf32> -> vector<8x192xf32>
    %260 = vector.extract_strided_slice %251 {offsets = [0, 0], sizes = [8, 32], strides = [1, 1]} : vector<8x96xf32> to vector<8x32xf32>
    %261 = vector.extract_strided_slice %259 {offsets = [0, 0], sizes = [8, 32], strides = [1, 1]} : vector<8x192xf32> to vector<8x32xf32>
    %262 = arith.addf %260, %261 : vector<8x32xf32>
    %263 = arith.negf %262 : vector<8x32xf32>
    %264 = math.exp %263 : vector<8x32xf32>
    %cst_79 = arith.constant 1.000000e+00 : f32
    %265 = vector.broadcast %cst_79 : f32 to vector<8x32xf32>
    %266 = arith.addf %265, %264 : vector<8x32xf32>
    %267 = arith.divf %265, %266 : vector<8x32xf32>
    %268 = vector.extract_strided_slice %251 {offsets = [0, 32], sizes = [8, 32], strides = [1, 1]} : vector<8x96xf32> to vector<8x32xf32>
    %269 = vector.extract_strided_slice %259 {offsets = [0, 32], sizes = [8, 32], strides = [1, 1]} : vector<8x192xf32> to vector<8x32xf32>
    %270 = arith.addf %268, %269 : vector<8x32xf32>
    %271 = arith.negf %270 : vector<8x32xf32>
    %272 = math.exp %271 : vector<8x32xf32>
    %cst_80 = arith.constant 1.000000e+00 : f32
    %273 = vector.broadcast %cst_80 : f32 to vector<8x32xf32>
    %274 = arith.addf %273, %272 : vector<8x32xf32>
    %275 = arith.divf %273, %274 : vector<8x32xf32>
    %276 = vector.extract_strided_slice %251 {offsets = [0, 64], sizes = [8, 32], strides = [1, 1]} : vector<8x96xf32> to vector<8x32xf32>
    %277 = vector.extract_strided_slice %259 {offsets = [0, 64], sizes = [8, 32], strides = [1, 1]} : vector<8x192xf32> to vector<8x32xf32>
    %278 = arith.addf %277, %7 : vector<8x32xf32>
    %279 = arith.mulf %267, %278 : vector<8x32xf32>
    %280 = arith.addf %276, %279 : vector<8x32xf32>
    %281 = math.tanh %280 : vector<8x32xf32>
    %cst_81 = arith.constant 1.000000e+00 : f32
    %282 = vector.broadcast %cst_81 : f32 to vector<8x32xf32>
    %283 = arith.subf %282, %275 : vector<8x32xf32>
    %284 = arith.mulf %283, %281 : vector<8x32xf32>
    %285 = vector.extract_strided_slice %257 {offsets = [0, 0], sizes = [8, 32], strides = [1, 1]} : vector<8x64xf32> to vector<8x32xf32>
    %286 = arith.mulf %275, %285 : vector<8x32xf32>
    %287 = arith.addf %284, %286 : vector<8x32xf32>
    %288 = vector.extract_strided_slice %256 {offsets = [0, 0], sizes = [8, 32], strides = [1, 1]} : vector<8x96xf32> to vector<8x32xf32>
    %289 = vector.extract_strided_slice %259 {offsets = [0, 96], sizes = [8, 32], strides = [1, 1]} : vector<8x192xf32> to vector<8x32xf32>
    %290 = arith.addf %288, %289 : vector<8x32xf32>
    %291 = arith.negf %290 : vector<8x32xf32>
    %292 = math.exp %291 : vector<8x32xf32>
    %cst_82 = arith.constant 1.000000e+00 : f32
    %293 = vector.broadcast %cst_82 : f32 to vector<8x32xf32>
    %294 = arith.addf %293, %292 : vector<8x32xf32>
    %295 = arith.divf %293, %294 : vector<8x32xf32>
    %296 = vector.extract_strided_slice %256 {offsets = [0, 32], sizes = [8, 32], strides = [1, 1]} : vector<8x96xf32> to vector<8x32xf32>
    %297 = vector.extract_strided_slice %259 {offsets = [0, 128], sizes = [8, 32], strides = [1, 1]} : vector<8x192xf32> to vector<8x32xf32>
    %298 = arith.addf %296, %297 : vector<8x32xf32>
    %299 = arith.negf %298 : vector<8x32xf32>
    %300 = math.exp %299 : vector<8x32xf32>
    %cst_83 = arith.constant 1.000000e+00 : f32
    %301 = vector.broadcast %cst_83 : f32 to vector<8x32xf32>
    %302 = arith.addf %301, %300 : vector<8x32xf32>
    %303 = arith.divf %301, %302 : vector<8x32xf32>
    %304 = vector.extract_strided_slice %256 {offsets = [0, 64], sizes = [8, 32], strides = [1, 1]} : vector<8x96xf32> to vector<8x32xf32>
    %305 = vector.extract_strided_slice %259 {offsets = [0, 160], sizes = [8, 32], strides = [1, 1]} : vector<8x192xf32> to vector<8x32xf32>
    %306 = arith.addf %305, %10 : vector<8x32xf32>
    %307 = arith.mulf %295, %306 : vector<8x32xf32>
    %308 = arith.addf %304, %307 : vector<8x32xf32>
    %309 = math.tanh %308 : vector<8x32xf32>
    %cst_84 = arith.constant 1.000000e+00 : f32
    %310 = vector.broadcast %cst_84 : f32 to vector<8x32xf32>
    %311 = arith.subf %310, %303 : vector<8x32xf32>
    %312 = arith.mulf %311, %309 : vector<8x32xf32>
    %313 = vector.extract_strided_slice %257 {offsets = [0, 32], sizes = [8, 32], strides = [1, 1]} : vector<8x64xf32> to vector<8x32xf32>
    %314 = arith.mulf %303, %313 : vector<8x32xf32>
    %315 = arith.addf %312, %314 : vector<8x32xf32>
    %c0_85 = arith.constant 0 : index
    %c0_86 = arith.constant 0 : index
    %316 = vector.load %arg7[%c0_85, %c0_86] : memref<8x64xf32, #tpu.memory_space<vmem>>, vector<8x32xf32>
    tpu.vector_store %arg7[%c0_85, %c0_86], %287 {strides = array<i32>} : memref<8x64xf32, #tpu.memory_space<vmem>>, vector<8x32xf32>,
    %c0_87 = arith.constant 0 : index
    %c32_88 = arith.constant 32 : index
    %317 = vector.load %arg7[%c0_87, %c32_88] : memref<8x64xf32, #tpu.memory_space<vmem>>, vector<8x32xf32>
    tpu.vector_store %arg7[%c0_87, %c32_88], %315 {strides = array<i32>} : memref<8x64xf32, #tpu.memory_space<vmem>>, vector<8x32xf32>,
    %318 = arith.index_cast %c3_i32 : i32 to index
    %c0_89 = arith.constant 0 : index
    %c0_90 = arith.constant 0 : index
    %319 = vector.load %arg5[%318, %c0_89, %c0_90] : memref<8x8x32xf32, #tpu.memory_space<vmem>>, vector<1x8x32xf32>
    %320 = vector.shape_cast %319 : vector<1x8x32xf32> to vector<8x32xf32>
    %321 = vector.shape_cast %287 : vector<8x32xf32> to vector<1x8x32xf32>
    tpu.vector_store %arg5[%318, %c0_89, %c0_90], %321 {strides = array<i32>} : memref<8x8x32xf32, #tpu.memory_space<vmem>>, vector<1x8x32xf32>,
    %c7_i32_91 = arith.constant 7 : i32
    %322 = arith.subi %c7_i32_91, %c3_i32 : i32
    %323 = arith.index_cast %322 : i32 to index
    %c0_92 = arith.constant 0 : index
    %c0_93 = arith.constant 0 : index
    %324 = vector.load %arg6[%323, %c0_92, %c0_93] : memref<8x8x32xf32, #tpu.memory_space<vmem>>, vector<1x8x32xf32>
    %325 = vector.shape_cast %324 : vector<1x8x32xf32> to vector<8x32xf32>
    %326 = vector.shape_cast %315 : vector<8x32xf32> to vector<1x8x32xf32>
    tpu.vector_store %arg6[%323, %c0_92, %c0_93], %326 {strides = array<i32>} : memref<8x8x32xf32, #tpu.memory_space<vmem>>, vector<1x8x32xf32>,
    %c4_i32 = arith.constant 4 : i32
    %327 = arith.index_cast %c4_i32 : i32 to index
    %c0_94 = arith.constant 0 : index
    %c0_95 = arith.constant 0 : index
    %328 = vector.load %arg1[%327, %c0_94, %c0_95] : memref<8x8x96xbf16, #tpu.memory_space<vmem>>, vector<1x8x96xbf16>
    %329 = vector.shape_cast %328 : vector<1x8x96xbf16> to vector<8x96xbf16>
    %330 = arith.extf %329 : vector<8x96xbf16> to vector<8x96xf32>
    %c7_i32_96 = arith.constant 7 : i32
    %331 = arith.subi %c7_i32_96, %c4_i32 : i32
    %332 = arith.index_cast %331 : i32 to index
    %c0_97 = arith.constant 0 : index
    %c0_98 = arith.constant 0 : index
    %333 = vector.load %arg2[%332, %c0_97, %c0_98] : memref<8x8x96xbf16, #tpu.memory_space<vmem>>, vector<1x8x96xbf16>
    %334 = vector.shape_cast %333 : vector<1x8x96xbf16> to vector<8x96xbf16>
    %335 = arith.extf %334 : vector<8x96xbf16> to vector<8x96xf32>
    %c0_99 = arith.constant 0 : index
    %c0_100 = arith.constant 0 : index
    %336 = vector.load %arg7[%c0_99, %c0_100] : memref<8x64xf32, #tpu.memory_space<vmem>>, vector<8x64xf32>
    %337 = arith.truncf %336 : vector<8x64xf32> to vector<8x64xbf16>
    %cst_101 = arith.constant dense<0.000000e+00> : vector<8x192xf32>
    %338 = tpu.matmul %337, %3, %cst_101 {dimension_numbers = #tpu.dot_dimension_numbers<[1], [0], [0], [1], [0, 0, 1, 1], [], []>} : vector<8x64xbf16>, vector<64x192xbf16>, vector<8x192xf32> -> vector<8x192xf32>
    %339 = vector.extract_strided_slice %330 {offsets = [0, 0], sizes = [8, 32], strides = [1, 1]} : vector<8x96xf32> to vector<8x32xf32>
    %340 = vector.extract_strided_slice %338 {offsets = [0, 0], sizes = [8, 32], strides = [1, 1]} : vector<8x192xf32> to vector<8x32xf32>
    %341 = arith.addf %339, %340 : vector<8x32xf32>
    %342 = arith.negf %341 : vector<8x32xf32>
    %343 = math.exp %342 : vector<8x32xf32>
    %cst_102 = arith.constant 1.000000e+00 : f32
    %344 = vector.broadcast %cst_102 : f32 to vector<8x32xf32>
    %345 = arith.addf %344, %343 : vector<8x32xf32>
    %346 = arith.divf %344, %345 : vector<8x32xf32>
    %347 = vector.extract_strided_slice %330 {offsets = [0, 32], sizes = [8, 32], strides = [1, 1]} : vector<8x96xf32> to vector<8x32xf32>
    %348 = vector.extract_strided_slice %338 {offsets = [0, 32], sizes = [8, 32], strides = [1, 1]} : vector<8x192xf32> to vector<8x32xf32>
    %349 = arith.addf %347, %348 : vector<8x32xf32>
    %350 = arith.negf %349 : vector<8x32xf32>
    %351 = math.exp %350 : vector<8x32xf32>
    %cst_103 = arith.constant 1.000000e+00 : f32
    %352 = vector.broadcast %cst_103 : f32 to vector<8x32xf32>
    %353 = arith.addf %352, %351 : vector<8x32xf32>
    %354 = arith.divf %352, %353 : vector<8x32xf32>
    %355 = vector.extract_strided_slice %330 {offsets = [0, 64], sizes = [8, 32], strides = [1, 1]} : vector<8x96xf32> to vector<8x32xf32>
    %356 = vector.extract_strided_slice %338 {offsets = [0, 64], sizes = [8, 32], strides = [1, 1]} : vector<8x192xf32> to vector<8x32xf32>
    %357 = arith.addf %356, %7 : vector<8x32xf32>
    %358 = arith.mulf %346, %357 : vector<8x32xf32>
    %359 = arith.addf %355, %358 : vector<8x32xf32>
    %360 = math.tanh %359 : vector<8x32xf32>
    %cst_104 = arith.constant 1.000000e+00 : f32
    %361 = vector.broadcast %cst_104 : f32 to vector<8x32xf32>
    %362 = arith.subf %361, %354 : vector<8x32xf32>
    %363 = arith.mulf %362, %360 : vector<8x32xf32>
    %364 = vector.extract_strided_slice %336 {offsets = [0, 0], sizes = [8, 32], strides = [1, 1]} : vector<8x64xf32> to vector<8x32xf32>
    %365 = arith.mulf %354, %364 : vector<8x32xf32>
    %366 = arith.addf %363, %365 : vector<8x32xf32>
    %367 = vector.extract_strided_slice %335 {offsets = [0, 0], sizes = [8, 32], strides = [1, 1]} : vector<8x96xf32> to vector<8x32xf32>
    %368 = vector.extract_strided_slice %338 {offsets = [0, 96], sizes = [8, 32], strides = [1, 1]} : vector<8x192xf32> to vector<8x32xf32>
    %369 = arith.addf %367, %368 : vector<8x32xf32>
    %370 = arith.negf %369 : vector<8x32xf32>
    %371 = math.exp %370 : vector<8x32xf32>
    %cst_105 = arith.constant 1.000000e+00 : f32
    %372 = vector.broadcast %cst_105 : f32 to vector<8x32xf32>
    %373 = arith.addf %372, %371 : vector<8x32xf32>
    %374 = arith.divf %372, %373 : vector<8x32xf32>
    %375 = vector.extract_strided_slice %335 {offsets = [0, 32], sizes = [8, 32], strides = [1, 1]} : vector<8x96xf32> to vector<8x32xf32>
    %376 = vector.extract_strided_slice %338 {offsets = [0, 128], sizes = [8, 32], strides = [1, 1]} : vector<8x192xf32> to vector<8x32xf32>
    %377 = arith.addf %375, %376 : vector<8x32xf32>
    %378 = arith.negf %377 : vector<8x32xf32>
    %379 = math.exp %378 : vector<8x32xf32>
    %cst_106 = arith.constant 1.000000e+00 : f32
    %380 = vector.broadcast %cst_106 : f32 to vector<8x32xf32>
    %381 = arith.addf %380, %379 : vector<8x32xf32>
    %382 = arith.divf %380, %381 : vector<8x32xf32>
    %383 = vector.extract_strided_slice %335 {offsets = [0, 64], sizes = [8, 32], strides = [1, 1]} : vector<8x96xf32> to vector<8x32xf32>
    %384 = vector.extract_strided_slice %338 {offsets = [0, 160], sizes = [8, 32], strides = [1, 1]} : vector<8x192xf32> to vector<8x32xf32>
    %385 = arith.addf %384, %10 : vector<8x32xf32>
    %386 = arith.mulf %374, %385 : vector<8x32xf32>
    %387 = arith.addf %383, %386 : vector<8x32xf32>
    %388 = math.tanh %387 : vector<8x32xf32>
    %cst_107 = arith.constant 1.000000e+00 : f32
    %389 = vector.broadcast %cst_107 : f32 to vector<8x32xf32>
    %390 = arith.subf %389, %382 : vector<8x32xf32>
    %391 = arith.mulf %390, %388 : vector<8x32xf32>
    %392 = vector.extract_strided_slice %336 {offsets = [0, 32], sizes = [8, 32], strides = [1, 1]} : vector<8x64xf32> to vector<8x32xf32>
    %393 = arith.mulf %382, %392 : vector<8x32xf32>
    %394 = arith.addf %391, %393 : vector<8x32xf32>
    %c0_108 = arith.constant 0 : index
    %c0_109 = arith.constant 0 : index
    %395 = vector.load %arg7[%c0_108, %c0_109] : memref<8x64xf32, #tpu.memory_space<vmem>>, vector<8x32xf32>
    tpu.vector_store %arg7[%c0_108, %c0_109], %366 {strides = array<i32>} : memref<8x64xf32, #tpu.memory_space<vmem>>, vector<8x32xf32>,
    %c0_110 = arith.constant 0 : index
    %c32_111 = arith.constant 32 : index
    %396 = vector.load %arg7[%c0_110, %c32_111] : memref<8x64xf32, #tpu.memory_space<vmem>>, vector<8x32xf32>
    tpu.vector_store %arg7[%c0_110, %c32_111], %394 {strides = array<i32>} : memref<8x64xf32, #tpu.memory_space<vmem>>, vector<8x32xf32>,
    %397 = arith.index_cast %c4_i32 : i32 to index
    %c0_112 = arith.constant 0 : index
    %c0_113 = arith.constant 0 : index
    %398 = vector.load %arg5[%397, %c0_112, %c0_113] : memref<8x8x32xf32, #tpu.memory_space<vmem>>, vector<1x8x32xf32>
    %399 = vector.shape_cast %398 : vector<1x8x32xf32> to vector<8x32xf32>
    %400 = vector.shape_cast %366 : vector<8x32xf32> to vector<1x8x32xf32>
    tpu.vector_store %arg5[%397, %c0_112, %c0_113], %400 {strides = array<i32>} : memref<8x8x32xf32, #tpu.memory_space<vmem>>, vector<1x8x32xf32>,
    %c7_i32_114 = arith.constant 7 : i32
    %401 = arith.subi %c7_i32_114, %c4_i32 : i32
    %402 = arith.index_cast %401 : i32 to index
    %c0_115 = arith.constant 0 : index
    %c0_116 = arith.constant 0 : index
    %403 = vector.load %arg6[%402, %c0_115, %c0_116] : memref<8x8x32xf32, #tpu.memory_space<vmem>>, vector<1x8x32xf32>
    %404 = vector.shape_cast %403 : vector<1x8x32xf32> to vector<8x32xf32>
    %405 = vector.shape_cast %394 : vector<8x32xf32> to vector<1x8x32xf32>
    tpu.vector_store %arg6[%402, %c0_115, %c0_116], %405 {strides = array<i32>} : memref<8x8x32xf32, #tpu.memory_space<vmem>>, vector<1x8x32xf32>,
    %c5_i32 = arith.constant 5 : i32
    %406 = arith.index_cast %c5_i32 : i32 to index
    %c0_117 = arith.constant 0 : index
    %c0_118 = arith.constant 0 : index
    %407 = vector.load %arg1[%406, %c0_117, %c0_118] : memref<8x8x96xbf16, #tpu.memory_space<vmem>>, vector<1x8x96xbf16>
    %408 = vector.shape_cast %407 : vector<1x8x96xbf16> to vector<8x96xbf16>
    %409 = arith.extf %408 : vector<8x96xbf16> to vector<8x96xf32>
    %c7_i32_119 = arith.constant 7 : i32
    %410 = arith.subi %c7_i32_119, %c5_i32 : i32
    %411 = arith.index_cast %410 : i32 to index
    %c0_120 = arith.constant 0 : index
    %c0_121 = arith.constant 0 : index
    %412 = vector.load %arg2[%411, %c0_120, %c0_121] : memref<8x8x96xbf16, #tpu.memory_space<vmem>>, vector<1x8x96xbf16>
    %413 = vector.shape_cast %412 : vector<1x8x96xbf16> to vector<8x96xbf16>
    %414 = arith.extf %413 : vector<8x96xbf16> to vector<8x96xf32>
    %c0_122 = arith.constant 0 : index
    %c0_123 = arith.constant 0 : index
    %415 = vector.load %arg7[%c0_122, %c0_123] : memref<8x64xf32, #tpu.memory_space<vmem>>, vector<8x64xf32>
    %416 = arith.truncf %415 : vector<8x64xf32> to vector<8x64xbf16>
    %cst_124 = arith.constant dense<0.000000e+00> : vector<8x192xf32>
    %417 = tpu.matmul %416, %3, %cst_124 {dimension_numbers = #tpu.dot_dimension_numbers<[1], [0], [0], [1], [0, 0, 1, 1], [], []>} : vector<8x64xbf16>, vector<64x192xbf16>, vector<8x192xf32> -> vector<8x192xf32>
    %418 = vector.extract_strided_slice %409 {offsets = [0, 0], sizes = [8, 32], strides = [1, 1]} : vector<8x96xf32> to vector<8x32xf32>
    %419 = vector.extract_strided_slice %417 {offsets = [0, 0], sizes = [8, 32], strides = [1, 1]} : vector<8x192xf32> to vector<8x32xf32>
    %420 = arith.addf %418, %419 : vector<8x32xf32>
    %421 = arith.negf %420 : vector<8x32xf32>
    %422 = math.exp %421 : vector<8x32xf32>
    %cst_125 = arith.constant 1.000000e+00 : f32
    %423 = vector.broadcast %cst_125 : f32 to vector<8x32xf32>
    %424 = arith.addf %423, %422 : vector<8x32xf32>
    %425 = arith.divf %423, %424 : vector<8x32xf32>
    %426 = vector.extract_strided_slice %409 {offsets = [0, 32], sizes = [8, 32], strides = [1, 1]} : vector<8x96xf32> to vector<8x32xf32>
    %427 = vector.extract_strided_slice %417 {offsets = [0, 32], sizes = [8, 32], strides = [1, 1]} : vector<8x192xf32> to vector<8x32xf32>
    %428 = arith.addf %426, %427 : vector<8x32xf32>
    %429 = arith.negf %428 : vector<8x32xf32>
    %430 = math.exp %429 : vector<8x32xf32>
    %cst_126 = arith.constant 1.000000e+00 : f32
    %431 = vector.broadcast %cst_126 : f32 to vector<8x32xf32>
    %432 = arith.addf %431, %430 : vector<8x32xf32>
    %433 = arith.divf %431, %432 : vector<8x32xf32>
    %434 = vector.extract_strided_slice %409 {offsets = [0, 64], sizes = [8, 32], strides = [1, 1]} : vector<8x96xf32> to vector<8x32xf32>
    %435 = vector.extract_strided_slice %417 {offsets = [0, 64], sizes = [8, 32], strides = [1, 1]} : vector<8x192xf32> to vector<8x32xf32>
    %436 = arith.addf %435, %7 : vector<8x32xf32>
    %437 = arith.mulf %425, %436 : vector<8x32xf32>
    %438 = arith.addf %434, %437 : vector<8x32xf32>
    %439 = math.tanh %438 : vector<8x32xf32>
    %cst_127 = arith.constant 1.000000e+00 : f32
    %440 = vector.broadcast %cst_127 : f32 to vector<8x32xf32>
    %441 = arith.subf %440, %433 : vector<8x32xf32>
    %442 = arith.mulf %441, %439 : vector<8x32xf32>
    %443 = vector.extract_strided_slice %415 {offsets = [0, 0], sizes = [8, 32], strides = [1, 1]} : vector<8x64xf32> to vector<8x32xf32>
    %444 = arith.mulf %433, %443 : vector<8x32xf32>
    %445 = arith.addf %442, %444 : vector<8x32xf32>
    %446 = vector.extract_strided_slice %414 {offsets = [0, 0], sizes = [8, 32], strides = [1, 1]} : vector<8x96xf32> to vector<8x32xf32>
    %447 = vector.extract_strided_slice %417 {offsets = [0, 96], sizes = [8, 32], strides = [1, 1]} : vector<8x192xf32> to vector<8x32xf32>
    %448 = arith.addf %446, %447 : vector<8x32xf32>
    %449 = arith.negf %448 : vector<8x32xf32>
    %450 = math.exp %449 : vector<8x32xf32>
    %cst_128 = arith.constant 1.000000e+00 : f32
    %451 = vector.broadcast %cst_128 : f32 to vector<8x32xf32>
    %452 = arith.addf %451, %450 : vector<8x32xf32>
    %453 = arith.divf %451, %452 : vector<8x32xf32>
    %454 = vector.extract_strided_slice %414 {offsets = [0, 32], sizes = [8, 32], strides = [1, 1]} : vector<8x96xf32> to vector<8x32xf32>
    %455 = vector.extract_strided_slice %417 {offsets = [0, 128], sizes = [8, 32], strides = [1, 1]} : vector<8x192xf32> to vector<8x32xf32>
    %456 = arith.addf %454, %455 : vector<8x32xf32>
    %457 = arith.negf %456 : vector<8x32xf32>
    %458 = math.exp %457 : vector<8x32xf32>
    %cst_129 = arith.constant 1.000000e+00 : f32
    %459 = vector.broadcast %cst_129 : f32 to vector<8x32xf32>
    %460 = arith.addf %459, %458 : vector<8x32xf32>
    %461 = arith.divf %459, %460 : vector<8x32xf32>
    %462 = vector.extract_strided_slice %414 {offsets = [0, 64], sizes = [8, 32], strides = [1, 1]} : vector<8x96xf32> to vector<8x32xf32>
    %463 = vector.extract_strided_slice %417 {offsets = [0, 160], sizes = [8, 32], strides = [1, 1]} : vector<8x192xf32> to vector<8x32xf32>
    %464 = arith.addf %463, %10 : vector<8x32xf32>
    %465 = arith.mulf %453, %464 : vector<8x32xf32>
    %466 = arith.addf %462, %465 : vector<8x32xf32>
    %467 = math.tanh %466 : vector<8x32xf32>
    %cst_130 = arith.constant 1.000000e+00 : f32
    %468 = vector.broadcast %cst_130 : f32 to vector<8x32xf32>
    %469 = arith.subf %468, %461 : vector<8x32xf32>
    %470 = arith.mulf %469, %467 : vector<8x32xf32>
    %471 = vector.extract_strided_slice %415 {offsets = [0, 32], sizes = [8, 32], strides = [1, 1]} : vector<8x64xf32> to vector<8x32xf32>
    %472 = arith.mulf %461, %471 : vector<8x32xf32>
    %473 = arith.addf %470, %472 : vector<8x32xf32>
    %c0_131 = arith.constant 0 : index
    %c0_132 = arith.constant 0 : index
    %474 = vector.load %arg7[%c0_131, %c0_132] : memref<8x64xf32, #tpu.memory_space<vmem>>, vector<8x32xf32>
    tpu.vector_store %arg7[%c0_131, %c0_132], %445 {strides = array<i32>} : memref<8x64xf32, #tpu.memory_space<vmem>>, vector<8x32xf32>,
    %c0_133 = arith.constant 0 : index
    %c32_134 = arith.constant 32 : index
    %475 = vector.load %arg7[%c0_133, %c32_134] : memref<8x64xf32, #tpu.memory_space<vmem>>, vector<8x32xf32>
    tpu.vector_store %arg7[%c0_133, %c32_134], %473 {strides = array<i32>} : memref<8x64xf32, #tpu.memory_space<vmem>>, vector<8x32xf32>,
    %476 = arith.index_cast %c5_i32 : i32 to index
    %c0_135 = arith.constant 0 : index
    %c0_136 = arith.constant 0 : index
    %477 = vector.load %arg5[%476, %c0_135, %c0_136] : memref<8x8x32xf32, #tpu.memory_space<vmem>>, vector<1x8x32xf32>
    %478 = vector.shape_cast %477 : vector<1x8x32xf32> to vector<8x32xf32>
    %479 = vector.shape_cast %445 : vector<8x32xf32> to vector<1x8x32xf32>
    tpu.vector_store %arg5[%476, %c0_135, %c0_136], %479 {strides = array<i32>} : memref<8x8x32xf32, #tpu.memory_space<vmem>>, vector<1x8x32xf32>,
    %c7_i32_137 = arith.constant 7 : i32
    %480 = arith.subi %c7_i32_137, %c5_i32 : i32
    %481 = arith.index_cast %480 : i32 to index
    %c0_138 = arith.constant 0 : index
    %c0_139 = arith.constant 0 : index
    %482 = vector.load %arg6[%481, %c0_138, %c0_139] : memref<8x8x32xf32, #tpu.memory_space<vmem>>, vector<1x8x32xf32>
    %483 = vector.shape_cast %482 : vector<1x8x32xf32> to vector<8x32xf32>
    %484 = vector.shape_cast %473 : vector<8x32xf32> to vector<1x8x32xf32>
    tpu.vector_store %arg6[%481, %c0_138, %c0_139], %484 {strides = array<i32>} : memref<8x8x32xf32, #tpu.memory_space<vmem>>, vector<1x8x32xf32>,
    %c6_i32 = arith.constant 6 : i32
    %485 = arith.index_cast %c6_i32 : i32 to index
    %c0_140 = arith.constant 0 : index
    %c0_141 = arith.constant 0 : index
    %486 = vector.load %arg1[%485, %c0_140, %c0_141] : memref<8x8x96xbf16, #tpu.memory_space<vmem>>, vector<1x8x96xbf16>
    %487 = vector.shape_cast %486 : vector<1x8x96xbf16> to vector<8x96xbf16>
    %488 = arith.extf %487 : vector<8x96xbf16> to vector<8x96xf32>
    %c7_i32_142 = arith.constant 7 : i32
    %489 = arith.subi %c7_i32_142, %c6_i32 : i32
    %490 = arith.index_cast %489 : i32 to index
    %c0_143 = arith.constant 0 : index
    %c0_144 = arith.constant 0 : index
    %491 = vector.load %arg2[%490, %c0_143, %c0_144] : memref<8x8x96xbf16, #tpu.memory_space<vmem>>, vector<1x8x96xbf16>
    %492 = vector.shape_cast %491 : vector<1x8x96xbf16> to vector<8x96xbf16>
    %493 = arith.extf %492 : vector<8x96xbf16> to vector<8x96xf32>
    %c0_145 = arith.constant 0 : index
    %c0_146 = arith.constant 0 : index
    %494 = vector.load %arg7[%c0_145, %c0_146] : memref<8x64xf32, #tpu.memory_space<vmem>>, vector<8x64xf32>
    %495 = arith.truncf %494 : vector<8x64xf32> to vector<8x64xbf16>
    %cst_147 = arith.constant dense<0.000000e+00> : vector<8x192xf32>
    %496 = tpu.matmul %495, %3, %cst_147 {dimension_numbers = #tpu.dot_dimension_numbers<[1], [0], [0], [1], [0, 0, 1, 1], [], []>} : vector<8x64xbf16>, vector<64x192xbf16>, vector<8x192xf32> -> vector<8x192xf32>
    %497 = vector.extract_strided_slice %488 {offsets = [0, 0], sizes = [8, 32], strides = [1, 1]} : vector<8x96xf32> to vector<8x32xf32>
    %498 = vector.extract_strided_slice %496 {offsets = [0, 0], sizes = [8, 32], strides = [1, 1]} : vector<8x192xf32> to vector<8x32xf32>
    %499 = arith.addf %497, %498 : vector<8x32xf32>
    %500 = arith.negf %499 : vector<8x32xf32>
    %501 = math.exp %500 : vector<8x32xf32>
    %cst_148 = arith.constant 1.000000e+00 : f32
    %502 = vector.broadcast %cst_148 : f32 to vector<8x32xf32>
    %503 = arith.addf %502, %501 : vector<8x32xf32>
    %504 = arith.divf %502, %503 : vector<8x32xf32>
    %505 = vector.extract_strided_slice %488 {offsets = [0, 32], sizes = [8, 32], strides = [1, 1]} : vector<8x96xf32> to vector<8x32xf32>
    %506 = vector.extract_strided_slice %496 {offsets = [0, 32], sizes = [8, 32], strides = [1, 1]} : vector<8x192xf32> to vector<8x32xf32>
    %507 = arith.addf %505, %506 : vector<8x32xf32>
    %508 = arith.negf %507 : vector<8x32xf32>
    %509 = math.exp %508 : vector<8x32xf32>
    %cst_149 = arith.constant 1.000000e+00 : f32
    %510 = vector.broadcast %cst_149 : f32 to vector<8x32xf32>
    %511 = arith.addf %510, %509 : vector<8x32xf32>
    %512 = arith.divf %510, %511 : vector<8x32xf32>
    %513 = vector.extract_strided_slice %488 {offsets = [0, 64], sizes = [8, 32], strides = [1, 1]} : vector<8x96xf32> to vector<8x32xf32>
    %514 = vector.extract_strided_slice %496 {offsets = [0, 64], sizes = [8, 32], strides = [1, 1]} : vector<8x192xf32> to vector<8x32xf32>
    %515 = arith.addf %514, %7 : vector<8x32xf32>
    %516 = arith.mulf %504, %515 : vector<8x32xf32>
    %517 = arith.addf %513, %516 : vector<8x32xf32>
    %518 = math.tanh %517 : vector<8x32xf32>
    %cst_150 = arith.constant 1.000000e+00 : f32
    %519 = vector.broadcast %cst_150 : f32 to vector<8x32xf32>
    %520 = arith.subf %519, %512 : vector<8x32xf32>
    %521 = arith.mulf %520, %518 : vector<8x32xf32>
    %522 = vector.extract_strided_slice %494 {offsets = [0, 0], sizes = [8, 32], strides = [1, 1]} : vector<8x64xf32> to vector<8x32xf32>
    %523 = arith.mulf %512, %522 : vector<8x32xf32>
    %524 = arith.addf %521, %523 : vector<8x32xf32>
    %525 = vector.extract_strided_slice %493 {offsets = [0, 0], sizes = [8, 32], strides = [1, 1]} : vector<8x96xf32> to vector<8x32xf32>
    %526 = vector.extract_strided_slice %496 {offsets = [0, 96], sizes = [8, 32], strides = [1, 1]} : vector<8x192xf32> to vector<8x32xf32>
    %527 = arith.addf %525, %526 : vector<8x32xf32>
    %528 = arith.negf %527 : vector<8x32xf32>
    %529 = math.exp %528 : vector<8x32xf32>
    %cst_151 = arith.constant 1.000000e+00 : f32
    %530 = vector.broadcast %cst_151 : f32 to vector<8x32xf32>
    %531 = arith.addf %530, %529 : vector<8x32xf32>
    %532 = arith.divf %530, %531 : vector<8x32xf32>
    %533 = vector.extract_strided_slice %493 {offsets = [0, 32], sizes = [8, 32], strides = [1, 1]} : vector<8x96xf32> to vector<8x32xf32>
    %534 = vector.extract_strided_slice %496 {offsets = [0, 128], sizes = [8, 32], strides = [1, 1]} : vector<8x192xf32> to vector<8x32xf32>
    %535 = arith.addf %533, %534 : vector<8x32xf32>
    %536 = arith.negf %535 : vector<8x32xf32>
    %537 = math.exp %536 : vector<8x32xf32>
    %cst_152 = arith.constant 1.000000e+00 : f32
    %538 = vector.broadcast %cst_152 : f32 to vector<8x32xf32>
    %539 = arith.addf %538, %537 : vector<8x32xf32>
    %540 = arith.divf %538, %539 : vector<8x32xf32>
    %541 = vector.extract_strided_slice %493 {offsets = [0, 64], sizes = [8, 32], strides = [1, 1]} : vector<8x96xf32> to vector<8x32xf32>
    %542 = vector.extract_strided_slice %496 {offsets = [0, 160], sizes = [8, 32], strides = [1, 1]} : vector<8x192xf32> to vector<8x32xf32>
    %543 = arith.addf %542, %10 : vector<8x32xf32>
    %544 = arith.mulf %532, %543 : vector<8x32xf32>
    %545 = arith.addf %541, %544 : vector<8x32xf32>
    %546 = math.tanh %545 : vector<8x32xf32>
    %cst_153 = arith.constant 1.000000e+00 : f32
    %547 = vector.broadcast %cst_153 : f32 to vector<8x32xf32>
    %548 = arith.subf %547, %540 : vector<8x32xf32>
    %549 = arith.mulf %548, %546 : vector<8x32xf32>
    %550 = vector.extract_strided_slice %494 {offsets = [0, 32], sizes = [8, 32], strides = [1, 1]} : vector<8x64xf32> to vector<8x32xf32>
    %551 = arith.mulf %540, %550 : vector<8x32xf32>
    %552 = arith.addf %549, %551 : vector<8x32xf32>
    %c0_154 = arith.constant 0 : index
    %c0_155 = arith.constant 0 : index
    %553 = vector.load %arg7[%c0_154, %c0_155] : memref<8x64xf32, #tpu.memory_space<vmem>>, vector<8x32xf32>
    tpu.vector_store %arg7[%c0_154, %c0_155], %524 {strides = array<i32>} : memref<8x64xf32, #tpu.memory_space<vmem>>, vector<8x32xf32>,
    %c0_156 = arith.constant 0 : index
    %c32_157 = arith.constant 32 : index
    %554 = vector.load %arg7[%c0_156, %c32_157] : memref<8x64xf32, #tpu.memory_space<vmem>>, vector<8x32xf32>
    tpu.vector_store %arg7[%c0_156, %c32_157], %552 {strides = array<i32>} : memref<8x64xf32, #tpu.memory_space<vmem>>, vector<8x32xf32>,
    %555 = arith.index_cast %c6_i32 : i32 to index
    %c0_158 = arith.constant 0 : index
    %c0_159 = arith.constant 0 : index
    %556 = vector.load %arg5[%555, %c0_158, %c0_159] : memref<8x8x32xf32, #tpu.memory_space<vmem>>, vector<1x8x32xf32>
    %557 = vector.shape_cast %556 : vector<1x8x32xf32> to vector<8x32xf32>
    %558 = vector.shape_cast %524 : vector<8x32xf32> to vector<1x8x32xf32>
    tpu.vector_store %arg5[%555, %c0_158, %c0_159], %558 {strides = array<i32>} : memref<8x8x32xf32, #tpu.memory_space<vmem>>, vector<1x8x32xf32>,
    %c7_i32_160 = arith.constant 7 : i32
    %559 = arith.subi %c7_i32_160, %c6_i32 : i32
    %560 = arith.index_cast %559 : i32 to index
    %c0_161 = arith.constant 0 : index
    %c0_162 = arith.constant 0 : index
    %561 = vector.load %arg6[%560, %c0_161, %c0_162] : memref<8x8x32xf32, #tpu.memory_space<vmem>>, vector<1x8x32xf32>
    %562 = vector.shape_cast %561 : vector<1x8x32xf32> to vector<8x32xf32>
    %563 = vector.shape_cast %552 : vector<8x32xf32> to vector<1x8x32xf32>
    tpu.vector_store %arg6[%560, %c0_161, %c0_162], %563 {strides = array<i32>} : memref<8x8x32xf32, #tpu.memory_space<vmem>>, vector<1x8x32xf32>,
    %c7_i32_163 = arith.constant 7 : i32
    %564 = arith.index_cast %c7_i32_163 : i32 to index
    %c0_164 = arith.constant 0 : index
    %c0_165 = arith.constant 0 : index
    %565 = vector.load %arg1[%564, %c0_164, %c0_165] : memref<8x8x96xbf16, #tpu.memory_space<vmem>>, vector<1x8x96xbf16>
    %566 = vector.shape_cast %565 : vector<1x8x96xbf16> to vector<8x96xbf16>
    %567 = arith.extf %566 : vector<8x96xbf16> to vector<8x96xf32>
    %c7_i32_166 = arith.constant 7 : i32
    %568 = arith.subi %c7_i32_166, %c7_i32_163 : i32
    %569 = arith.index_cast %568 : i32 to index
    %c0_167 = arith.constant 0 : index
    %c0_168 = arith.constant 0 : index
    %570 = vector.load %arg2[%569, %c0_167, %c0_168] : memref<8x8x96xbf16, #tpu.memory_space<vmem>>, vector<1x8x96xbf16>
    %571 = vector.shape_cast %570 : vector<1x8x96xbf16> to vector<8x96xbf16>
    %572 = arith.extf %571 : vector<8x96xbf16> to vector<8x96xf32>
    %c0_169 = arith.constant 0 : index
    %c0_170 = arith.constant 0 : index
    %573 = vector.load %arg7[%c0_169, %c0_170] : memref<8x64xf32, #tpu.memory_space<vmem>>, vector<8x64xf32>
    %574 = arith.truncf %573 : vector<8x64xf32> to vector<8x64xbf16>
    %cst_171 = arith.constant dense<0.000000e+00> : vector<8x192xf32>
    %575 = tpu.matmul %574, %3, %cst_171 {dimension_numbers = #tpu.dot_dimension_numbers<[1], [0], [0], [1], [0, 0, 1, 1], [], []>} : vector<8x64xbf16>, vector<64x192xbf16>, vector<8x192xf32> -> vector<8x192xf32>
    %576 = vector.extract_strided_slice %567 {offsets = [0, 0], sizes = [8, 32], strides = [1, 1]} : vector<8x96xf32> to vector<8x32xf32>
    %577 = vector.extract_strided_slice %575 {offsets = [0, 0], sizes = [8, 32], strides = [1, 1]} : vector<8x192xf32> to vector<8x32xf32>
    %578 = arith.addf %576, %577 : vector<8x32xf32>
    %579 = arith.negf %578 : vector<8x32xf32>
    %580 = math.exp %579 : vector<8x32xf32>
    %cst_172 = arith.constant 1.000000e+00 : f32
    %581 = vector.broadcast %cst_172 : f32 to vector<8x32xf32>
    %582 = arith.addf %581, %580 : vector<8x32xf32>
    %583 = arith.divf %581, %582 : vector<8x32xf32>
    %584 = vector.extract_strided_slice %567 {offsets = [0, 32], sizes = [8, 32], strides = [1, 1]} : vector<8x96xf32> to vector<8x32xf32>
    %585 = vector.extract_strided_slice %575 {offsets = [0, 32], sizes = [8, 32], strides = [1, 1]} : vector<8x192xf32> to vector<8x32xf32>
    %586 = arith.addf %584, %585 : vector<8x32xf32>
    %587 = arith.negf %586 : vector<8x32xf32>
    %588 = math.exp %587 : vector<8x32xf32>
    %cst_173 = arith.constant 1.000000e+00 : f32
    %589 = vector.broadcast %cst_173 : f32 to vector<8x32xf32>
    %590 = arith.addf %589, %588 : vector<8x32xf32>
    %591 = arith.divf %589, %590 : vector<8x32xf32>
    %592 = vector.extract_strided_slice %567 {offsets = [0, 64], sizes = [8, 32], strides = [1, 1]} : vector<8x96xf32> to vector<8x32xf32>
    %593 = vector.extract_strided_slice %575 {offsets = [0, 64], sizes = [8, 32], strides = [1, 1]} : vector<8x192xf32> to vector<8x32xf32>
    %594 = arith.addf %593, %7 : vector<8x32xf32>
    %595 = arith.mulf %583, %594 : vector<8x32xf32>
    %596 = arith.addf %592, %595 : vector<8x32xf32>
    %597 = math.tanh %596 : vector<8x32xf32>
    %cst_174 = arith.constant 1.000000e+00 : f32
    %598 = vector.broadcast %cst_174 : f32 to vector<8x32xf32>
    %599 = arith.subf %598, %591 : vector<8x32xf32>
    %600 = arith.mulf %599, %597 : vector<8x32xf32>
    %601 = vector.extract_strided_slice %573 {offsets = [0, 0], sizes = [8, 32], strides = [1, 1]} : vector<8x64xf32> to vector<8x32xf32>
    %602 = arith.mulf %591, %601 : vector<8x32xf32>
    %603 = arith.addf %600, %602 : vector<8x32xf32>
    %604 = vector.extract_strided_slice %572 {offsets = [0, 0], sizes = [8, 32], strides = [1, 1]} : vector<8x96xf32> to vector<8x32xf32>
    %605 = vector.extract_strided_slice %575 {offsets = [0, 96], sizes = [8, 32], strides = [1, 1]} : vector<8x192xf32> to vector<8x32xf32>
    %606 = arith.addf %604, %605 : vector<8x32xf32>
    %607 = arith.negf %606 : vector<8x32xf32>
    %608 = math.exp %607 : vector<8x32xf32>
    %cst_175 = arith.constant 1.000000e+00 : f32
    %609 = vector.broadcast %cst_175 : f32 to vector<8x32xf32>
    %610 = arith.addf %609, %608 : vector<8x32xf32>
    %611 = arith.divf %609, %610 : vector<8x32xf32>
    %612 = vector.extract_strided_slice %572 {offsets = [0, 32], sizes = [8, 32], strides = [1, 1]} : vector<8x96xf32> to vector<8x32xf32>
    %613 = vector.extract_strided_slice %575 {offsets = [0, 128], sizes = [8, 32], strides = [1, 1]} : vector<8x192xf32> to vector<8x32xf32>
    %614 = arith.addf %612, %613 : vector<8x32xf32>
    %615 = arith.negf %614 : vector<8x32xf32>
    %616 = math.exp %615 : vector<8x32xf32>
    %cst_176 = arith.constant 1.000000e+00 : f32
    %617 = vector.broadcast %cst_176 : f32 to vector<8x32xf32>
    %618 = arith.addf %617, %616 : vector<8x32xf32>
    %619 = arith.divf %617, %618 : vector<8x32xf32>
    %620 = vector.extract_strided_slice %572 {offsets = [0, 64], sizes = [8, 32], strides = [1, 1]} : vector<8x96xf32> to vector<8x32xf32>
    %621 = vector.extract_strided_slice %575 {offsets = [0, 160], sizes = [8, 32], strides = [1, 1]} : vector<8x192xf32> to vector<8x32xf32>
    %622 = arith.addf %621, %10 : vector<8x32xf32>
    %623 = arith.mulf %611, %622 : vector<8x32xf32>
    %624 = arith.addf %620, %623 : vector<8x32xf32>
    %625 = math.tanh %624 : vector<8x32xf32>
    %cst_177 = arith.constant 1.000000e+00 : f32
    %626 = vector.broadcast %cst_177 : f32 to vector<8x32xf32>
    %627 = arith.subf %626, %619 : vector<8x32xf32>
    %628 = arith.mulf %627, %625 : vector<8x32xf32>
    %629 = vector.extract_strided_slice %573 {offsets = [0, 32], sizes = [8, 32], strides = [1, 1]} : vector<8x64xf32> to vector<8x32xf32>
    %630 = arith.mulf %619, %629 : vector<8x32xf32>
    %631 = arith.addf %628, %630 : vector<8x32xf32>
    %c0_178 = arith.constant 0 : index
    %c0_179 = arith.constant 0 : index
    %632 = vector.load %arg7[%c0_178, %c0_179] : memref<8x64xf32, #tpu.memory_space<vmem>>, vector<8x32xf32>
    tpu.vector_store %arg7[%c0_178, %c0_179], %603 {strides = array<i32>} : memref<8x64xf32, #tpu.memory_space<vmem>>, vector<8x32xf32>,
    %c0_180 = arith.constant 0 : index
    %c32_181 = arith.constant 32 : index
    %633 = vector.load %arg7[%c0_180, %c32_181] : memref<8x64xf32, #tpu.memory_space<vmem>>, vector<8x32xf32>
    tpu.vector_store %arg7[%c0_180, %c32_181], %631 {strides = array<i32>} : memref<8x64xf32, #tpu.memory_space<vmem>>, vector<8x32xf32>,
    %634 = arith.index_cast %c7_i32_163 : i32 to index
    %c0_182 = arith.constant 0 : index
    %c0_183 = arith.constant 0 : index
    %635 = vector.load %arg5[%634, %c0_182, %c0_183] : memref<8x8x32xf32, #tpu.memory_space<vmem>>, vector<1x8x32xf32>
    %636 = vector.shape_cast %635 : vector<1x8x32xf32> to vector<8x32xf32>
    %637 = vector.shape_cast %603 : vector<8x32xf32> to vector<1x8x32xf32>
    tpu.vector_store %arg5[%634, %c0_182, %c0_183], %637 {strides = array<i32>} : memref<8x8x32xf32, #tpu.memory_space<vmem>>, vector<1x8x32xf32>,
    %c7_i32_184 = arith.constant 7 : i32
    %638 = arith.subi %c7_i32_184, %c7_i32_163 : i32
    %639 = arith.index_cast %638 : i32 to index
    %c0_185 = arith.constant 0 : index
    %c0_186 = arith.constant 0 : index
    %640 = vector.load %arg6[%639, %c0_185, %c0_186] : memref<8x8x32xf32, #tpu.memory_space<vmem>>, vector<1x8x32xf32>
    %641 = vector.shape_cast %640 : vector<1x8x32xf32> to vector<8x32xf32>
    %642 = vector.shape_cast %631 : vector<8x32xf32> to vector<1x8x32xf32>
    tpu.vector_store %arg6[%639, %c0_185, %c0_186], %642 {strides = array<i32>} : memref<8x8x32xf32, #tpu.memory_space<vmem>>, vector<1x8x32xf32>,
    %c8_i32 = arith.constant 8 : i32
    return
  }
  func.func @transform_0(%arg0: i32) -> (i32, i32, i32) {
    %c0_i32 = arith.constant 0 : i32
    %c0_i32_0 = arith.constant 0 : i32
    %c0_i32_1 = arith.constant 0 : i32
    return %arg0, %c0_i32, %c0_i32_0 : i32, i32, i32
  }
  func.func @transform_1(%arg0: i32) -> (i32, i32, i32) {
    %c0_i32 = arith.constant 0 : i32
    %0 = arith.subi %c0_i32, %arg0 : i32
    %c0_i32_0 = arith.constant 0 : i32
    %c0_i32_1 = arith.constant 0 : i32
    %c0_i32_2 = arith.constant 0 : i32
    return %0, %c0_i32_0, %c0_i32_1 : i32, i32, i32
  }
  func.func @transform_2(%arg0: i32) -> (i32, i32) {
    %c0_i32 = arith.constant 0 : i32
    %c0_i32_0 = arith.constant 0 : i32
    %c0_i32_1 = arith.constant 0 : i32
    return %c0_i32, %c0_i32_0 : i32, i32
  }
  func.func @transform_3(%arg0: i32) -> (i32, i32) {
    %c0_i32 = arith.constant 0 : i32
    %c0_i32_0 = arith.constant 0 : i32
    %c0_i32_1 = arith.constant 0 : i32
    return %c0_i32, %c0_i32_0 : i32, i32
  }
  func.func @transform_4(%arg0: i32) -> (i32, i32, i32) {
    %c0_i32 = arith.constant 0 : i32
    %c0_i32_0 = arith.constant 0 : i32
    %c0_i32_1 = arith.constant 0 : i32
    return %arg0, %c0_i32, %c0_i32_0 : i32, i32, i32
  }
  func.func @transform_5(%arg0: i32) -> (i32, i32, i32) {
    %c0_i32 = arith.constant 0 : i32
    %0 = arith.subi %c0_i32, %arg0 : i32
    %c0_i32_0 = arith.constant 0 : i32
    %c0_i32_1 = arith.constant 0 : i32
    %c0_i32_2 = arith.constant 0 : i32
    return %0, %c0_i32_0, %c0_i32_1 : i32, i32, i32
  }
}

</mosaic_0001>

<llo_original>
// kernel: bidirectional_gru.3
$region0: #{bidirectional_gru.3}
  #allocation0 [shape = 'u32[]', space=smem, size = 0x4, offset = 0x4, fixed_abs, tag = 'smem constant byte address 0x4 - core index']
  #allocation1 [shape = 'u32[144,128]{1,0:T(1,128)}', space=vmem, size = 0x12000, scoped, tag = 'internal scratch']
  %s0 = inlined_call_operand.vmem [shape: f32[64,32], index: 0, kind: input, shape index: {}, may-alias: {0,2}]
  %s1 = inlined_call_operand.vmem [shape: f32[64,32], index: 1, kind: input, shape index: {}]
  %s2 = inlined_call_operand.vmem [shape: f32[64,32], index: 2, kind: output, shape index: {}, may-alias: {0,2}]
  %s3 = sld [smem:[#allocation0]]
  $region18: #{bidirectional_gru.3} parent=0
    _
  %s5 = ssub.s32 1, %s3
  %s6 = scalar_select 0, %s5, %s3
  // Predicated region
  $region2: #{bidirectional_gru.3} parent=0 // pred_check
    _
  $region3: #{bidirectional_gru.3} parent=0 // pred_check_branch
    %8 = sbr.rel (0) target = $region5
  $region4: #{bidirectional_gru.3} parent=0 // pred_region
    _
  $region5: #{bidirectional_gru.3} parent=0 // pred_fallthru
    _
  // Predicated region
  $region6: #{bidirectional_gru.3} parent=0 // pred_check
    _
  $region7: #{bidirectional_gru.3} parent=0 // pred_check_branch
    %10 = sbr.rel (0) target = $region9
  $region8: #{bidirectional_gru.3} parent=0 // pred_region
    _
  $region9: #{bidirectional_gru.3} parent=0 // pred_fallthru
    _
  %v11 = vld [vmem:[%s0] sm:$0xff]
  %v12 = vld [vmem:[%s0 + $0x8] sm:$0xff]
  %v13 = vld [vmem:[%s0 + $0x10] sm:$0xff]
  %v14 = vld [vmem:[%s0 + $0x18] sm:$0xff]
  %v15 = vld [vmem:[%s0 + $0x20] sm:$0xff]
  %v16 = vld [vmem:[%s0 + $0x28] sm:$0xff]
  %v17 = vld [vmem:[%s0 + $0x30] sm:$0xff]
  %v18 = vld [vmem:[%s0 + $0x38] sm:$0xff]
  %v19 = vld [vmem:[%s1] sm:$0xff]
  %v20 = vld [vmem:[%s1 + $0x8] sm:$0xff]
  %v21 = vld [vmem:[%s1 + $0x10] sm:$0xff]
  %v22 = vld [vmem:[%s1 + $0x18] sm:$0xff]
  %v23 = vld [vmem:[%s1 + $0x20] sm:$0xff]
  %v24 = vld [vmem:[%s1 + $0x28] sm:$0xff]
  %v25 = vld [vmem:[%s1 + $0x30] sm:$0xff]
  %v26 = vld [vmem:[%s1 + $0x38] sm:$0xff]
  %v27 = vadd.f32 %v11, %v19
  %v28 = vadd.f32 %v12, %v20
  %v29 = vadd.f32 %v13, %v21
  %v30 = vadd.f32 %v14, %v22
  %v31 = vadd.f32 %v15, %v23
  %v32 = vadd.f32 %v16, %v24
  %v33 = vadd.f32 %v17, %v25
  %v34 = vadd.f32 %v18, %v26
  %vm35 = vcmask 261120
  %36 = vst.msk [vmem:[%s2] sm:$0xff] %vm35, %v27
  %37 = vst.msk [vmem:[%s2 + $0x8] sm:$0xff] %vm35, %v28
  %38 = vst.msk [vmem:[%s2 + $0x10] sm:$0xff] %vm35, %v29
  %39 = vst.msk [vmem:[%s2 + $0x18] sm:$0xff] %vm35, %v30
  %40 = vst.msk [vmem:[%s2 + $0x20] sm:$0xff] %vm35, %v31
  %41 = vst.msk [vmem:[%s2 + $0x28] sm:$0xff] %vm35, %v32
  %42 = vst.msk [vmem:[%s2 + $0x30] sm:$0xff] %vm35, %v33
  %43 = vst.msk [vmem:[%s2 + $0x38] sm:$0xff] %vm35, %v34
  // Predicated region
  $region10: #{bidirectional_gru.3} parent=0 // pred_check
    _
  $region11: #{bidirectional_gru.3} parent=0 // pred_check_branch
    %45 = sbr.rel (0) target = $region13
  $region12: #{bidirectional_gru.3} parent=0 // pred_region
    _
  $region13: #{bidirectional_gru.3} parent=0 // pred_fallthru
    _
  // Predicated region
  $region14: #{bidirectional_gru.3} parent=0 // pred_check
    _
  $region15: #{bidirectional_gru.3} parent=0 // pred_check_branch
    %47 = sbr.rel (0) target = $region17
  $region16: #{bidirectional_gru.3} parent=0 // pred_region
    _
  $region17: #{bidirectional_gru.3} parent=0 // pred_fallthru
    _

// kernel: bidirectional_gru.2
$region0: #{bidirectional_gru.2}
  #allocation0 [shape = 'u32[]', space=smem, size = 0x4, offset = 0x4, fixed_abs, tag = 'smem constant byte address 0x4 - core index']
  #allocation1 [shape = 'u32[144,128]{1,0:T(1,128)}', space=vmem, size = 0x12000, scoped, tag = 'internal scratch']
  #allocation2 [shape = 'f32[8,64]{1,0:T(8,128)}', space=vmem, size = 0x1000, scoped, tag = 'scratch operand']
  %s0 = inlined_call_operand.vmem [shape: bf16[8,8,96], index: 0, kind: input, shape index: {}]
  %s1 = inlined_call_operand.vmem [shape: bf16[8,8,96], index: 1, kind: input, shape index: {}]
  %s2 = inlined_call_operand.vmem [shape: bf16[64,192], index: 2, kind: input, shape index: {}]
  %s3 = inlined_call_operand.vmem [shape: f32[1,64], index: 3, kind: input, shape index: {}]
  %s4 = inlined_call_operand.vmem [shape: f32[8,8,32], index: 4, kind: output, shape index: {0}]
  %s5 = inlined_call_operand.vmem [shape: f32[8,8,32], index: 5, kind: output, shape index: {1}]
  %6 = xla_tuple %s4, %s5
  %s7 = sld [smem:[#allocation0]]
  $region38: #{bidirectional_gru.2} parent=0
    _
  %s9 = ssub.s32 1, %s7
  %s10 = scalar_select 0, %s9, %s7
  // Predicated region
  $region2: #{bidirectional_gru.2} parent=0 // pred_check
    _
  $region3: #{bidirectional_gru.2} parent=0 // pred_check_branch
    %12 = sbr.rel (0) target = $region5
  $region4: #{bidirectional_gru.2} parent=0 // pred_region
    _
  $region5: #{bidirectional_gru.2} parent=0 // pred_fallthru
    _
  // Predicated region
  $region6: #{bidirectional_gru.2} parent=0 // pred_check
    _
  $region7: #{bidirectional_gru.2} parent=0 // pred_check_branch
    %14 = sbr.rel (0) target = $region9
  $region8: #{bidirectional_gru.2} parent=0 // pred_region
    %s15 = ssub.s32 0, 0
    %s16 = smul.u32 8, %s15
    %p17 = scmp.lt.s32.totalorder %s16, 7
    %s18 = scalar_select %p17, %s16, 7
    %s19 = smul.addr %s18, 4
    %s20 = scalar_lea.vmem %s1, %s19
    %s21 = ssub.s32 0, 0
    %s22 = smul.u32 8, %s21
  $region9: #{bidirectional_gru.2} parent=0 // pred_fallthru
    _
  // Predicated region
  $region10: #{bidirectional_gru.2} parent=0 // pred_check
    _
  $region11: #{bidirectional_gru.2} parent=0 // pred_check_branch
    %24 = sbr.rel (0) target = $region13
  $region12: #{bidirectional_gru.2} parent=0 // pred_region
    _
  $region13: #{bidirectional_gru.2} parent=0 // pred_fallthru
    _
  // Predicated region
  $region14: #{bidirectional_gru.2} parent=0 // pred_check
    _
  $region15: #{bidirectional_gru.2} parent=0 // pred_check_branch
    %26 = sbr.rel (0) target = $region17
  $region16: #{bidirectional_gru.2} parent=0 // pred_region
    _
  $region17: #{bidirectional_gru.2} parent=0 // pred_fallthru
    _
  %s27 = ssub.s32 0, 0
  %s28 = smul.u32 8, %s27
  %p29 = scmp.lt.s32.totalorder %s28, 7
  %s30 = scalar_select %p29, %s28, 7
  %s31 = smul.addr %s30, 4
  %s32 = scalar_lea.vmem %s1, %s31
  %s33 = ssub.s32 0, 0
  %s34 = smul.u32 8, %s33
  %p35 = scmp.lt.s32.totalorder %s34, 7
  %s36 = scalar_select %p35, %s34, 7
  %s37 = smul.addr %s36, 8
  %s38 = scalar_lea.vmem %s5, %s37
  %s39 = ssub.s32 0, 0
  %s40 = smul.u32 8, %s39
  %p41 = scmp.lt.s32.totalorder %s40, 7
  %s42 = scalar_select %p41, %s40, 7
  %s43 = smul.addr %s42, 4
  %s44 = scalar_lea.vmem %s1, %s43
  %s45 = ssub.s32 0, 0
  %s46 = smul.u32 8, %s45
  %s47 = ssub.s32 0, 0
  %s48 = smul.u32 8, %s47
  %p49 = scmp.lt.s32.totalorder %s48, 7
  %s50 = scalar_select %p49, %s48, 7
  %s51 = smul.addr %s50, 8
  %s52 = scalar_lea.vmem %s5, %s51
  %s53 = ssub.s32 0, 0
  %s54 = smul.u32 8, %s53
  %p56 = scmp.eq.s32.totalorder 0, 0
  // Predicated region
  $region18: #{bidirectional_gru.2} parent=0 // pred_check
    %p57 = pneg %p56
  $region19: #{bidirectional_gru.2} parent=0 // pred_check_branch
    %59 = sbr.rel (%p57) target = $region21
  $region20: #{bidirectional_gru.2} parent=0 // pred_region
    %vm60 = vcmask 523264
    %61 = vst.msk [vmem:[#allocation2] sm:$0xff] %vm60, 0.0
  $region21: #{bidirectional_gru.2} parent=0 // pred_fallthru
    _
  %v62 = vld [vmem:[%s2] sm:$0xff]
  %v63 = vld [vmem:[%s2 + $0x8] sm:$0xff]
  %v64 = vld [vmem:[%s2 + $0x10] sm:$0xff]
  %v65 = vld [vmem:[%s2 + $0x18] sm:$0xff]
  %v66 = vld [vmem:[%s2 + $0x20] sm:$0xff]
  %v67 = vld [vmem:[%s2 + $0x28] sm:$0xff]
  %v68 = vld [vmem:[%s2 + $0x30] sm:$0xff]
  %v69 = vld [vmem:[%s2 + $0x38] sm:$0xff]
  %v70 = vld [vmem:[%s3] sm:$0x1]
  %v72 = vlaneseq
  %v73 = vshrl.u32 %v72, 7
  %v74 = vsub.s32 0, %v73
  %v75 = vrot.slane %v70, %v74
  %v77 = vld [vmem:[%s0] sm:$0xf]
  %v78 = vunpack.c.l.bf16 %v77
  %s79 = scalar_lea.vmem %s44, 28
  %v80 = vld [vmem:[%s79] sm:$0xf]
  %v81 = vunpack.c.l.bf16 %v80
  %v82 = vld [vmem:[#allocation2] sm:$0xff]
  %v83 = vpack.c.bf16 %v82, %v82
  %v92 = vunpack.c.l.b16 %v62
  %v93 = vunpack.c.h.b16 %v62
  %v94 = vunpack.c.l.b16 %v63
  %v95 = vunpack.c.h.b16 %v63
  %v96 = vunpack.c.l.b16 %v64
  %v97 = vunpack.c.h.b16 %v64
  %v98 = vunpack.c.l.b16 %v65
  %v99 = vunpack.c.h.b16 %v65
  %v100 = vunpack.c.l.b16 %v66
  %v101 = vunpack.c.h.b16 %v66
  %v102 = vunpack.c.l.b16 %v67
  %v103 = vunpack.c.h.b16 %v67
  %v104 = vunpack.c.l.b16 %v68
  %v105 = vunpack.c.h.b16 %v68
  %v106 = vunpack.c.l.b16 %v69
  %v107 = vunpack.c.h.b16 %v69
  %v108 = vpack.c.b16 %v94, %v92
  %v109 = vpack.c.b16 %v95, %v93
  %v110 = vpack.c.b16 %v98, %v96
  %v111 = vpack.c.b16 %v99, %v97
  %v112 = vpack.c.b16 %v102, %v100
  %v113 = vpack.c.b16 %v103, %v101
  %v114 = vpack.c.b16 %v106, %v104
  %v115 = vpack.c.b16 %v107, %v105
  %vm124 = vcmask 523264
  %v126 = vsel %vm124, %v83, 0
  %128 = vmatprep.subr.bf16.mxu0 %v109
  %129 = vmatpush1.bf16.msra.mxu0 %v108
  %130 = vmatprep.subr.bf16.mxu0 %v111
  %131 = vmatpush1.bf16.msra.mxu0 %v110
  %132 = vmatprep.subr.bf16.mxu0 %v113
  %133 = vmatpush1.bf16.msra.mxu0 %v112
  %134 = vmatprep.subr.bf16.mxu0 %v115
  %135 = vmatpush1.bf16.msra.mxu0 %v114
  %136 = vmatprep.subr.bf16.mxu0 0
  %137 = vmatpush1.bf16.msra.mxu0 0
  %138 = vmatprep.subr.bf16.mxu0 0
  %139 = vmatpush1.bf16.msra.mxu0 0
  %140 = vmatprep.subr.bf16.mxu0 0
  %141 = vmatpush1.bf16.msra.mxu0 0
  %142 = vmatprep.subr.bf16.mxu0 0
  %143 = vmatpush1.bf16.msra.mxu0 0
  %144 = vmatprep.subr.bf16.mxu0 0
  %145 = vmatpush1.bf16.msra.mxu0 0
  %146 = vmatprep.subr.bf16.mxu0 0
  %147 = vmatpush1.bf16.msra.mxu0 0
  %148 = vmatprep.subr.bf16.mxu0 0
  %149 = vmatpush1.bf16.msra.mxu0 0
  %150 = vmatprep.subr.bf16.mxu0 0
  %151 = vmatpush1.bf16.msra.mxu0 0
  %152 = vmatprep.subr.bf16.mxu0 0
  %153 = vmatpush1.bf16.msra.mxu0 0
  %154 = vmatprep.subr.bf16.mxu0 0
  %155 = vmatpush1.bf16.msra.mxu0 0
  %156 = vmatprep.subr.bf16.mxu0 0
  %157 = vmatpush1.bf16.msra.mxu0 0
  %158 = vmatprep.subr.bf16.mxu0 0
  %159 = vmatpush1.bf16.msra.mxu0 0
  %160 = vmatprep.mubr.bf16.mxu0 0
  %161 = vmatmul.mubr.bf16.gmra.mrb[0].mxu0 %v126
  %v162 = vpop.f32.mrb[0].mxu0
  %v163 = vadd.f32 0.0, %v162
  %v164 = vpop.f32.mrb[0].mxu0
  %v165 = vadd.f32 0.0, %v164
  %v166 = vpop.f32.mrb[0].mxu0
  %v167 = vpop.f32.mrb[0].mxu0
  %168 = vdwg.mxu0
  %v169 = vadd.f32 %v78, %v163
  %v170 = vxor.u32 %v169, 2147483648
  %v171 = vmul.f32 %v170, 1.442695
  %v172 = vpow.pop %v171
  %v173 = vadd.f32 %v172, 1.0
  %v174 = vrcp.pop %v173
  %v175 = vmul.f32 1.0, %v174
  %176 = vrot.lane.b32.xlu0 %v75, 64
  %v177 = vpop.permute.xlu0 %176
  %v179 = vadd.f32 %v163, %v177
  %181 = vrot.lane.b32.xlu0 %v179, 64
  %v182 = vpop.permute.xlu0 %181
  %v184 = vmul.f32 %v175, %v182
  %186 = vrot.lane.b32.xlu0 %v184, 64
  %v187 = vpop.permute.xlu0 %186
  %v189 = vadd.f32 %v78, %v187
  %v190 = vtanh.pop %v189
  %v191 = vsub.f32 1.0, %v175
  %193 = vrot.lane.b32.xlu0 %v190, 96
  %v194 = vpop.permute.xlu0 %193
  %v196 = vmul.f32 %v191, %v194
  %198 = vrot.lane.b32.xlu0 %v82, 32
  %v199 = vpop.permute.xlu0 %198
  %v201 = vmul.f32 %v175, %v199
  %v202 = vadd.f32 %v196, %v201
  %204 = vrot.lane.b32.xlu0 %v163, 32
  %v205 = vpop.permute.xlu0 %204
  %v207 = vadd.f32 %v81, %v205
  %v208 = vxor.u32 %v207, 2147483648
  %v209 = vmul.f32 %v208, 1.442695
  %v210 = vpow.pop %v209
  %v211 = vadd.f32 %v210, 1.0
  %v212 = vrcp.pop %v211
  %v213 = vmul.f32 1.0, %v212
  %215 = vrot.lane.b32.xlu0 %v165, 32
  %v216 = vpop.permute.xlu0 %215
  %v218 = vadd.f32 %v81, %v216
  %v219 = vxor.u32 %v218, 2147483648
  %v220 = vmul.f32 %v219, 1.442695
  %v221 = vpow.pop %v220
  %v222 = vadd.f32 %v221, 1.0
  %v223 = vrcp.pop %v222
  %v224 = vmul.f32 1.0, %v223
  %v225 = vadd.f32 %v165, %v75
  %227 = vrot.lane.b32.xlu0 %v225, 96
  %v228 = vpop.permute.xlu0 %227
  %v230 = vmul.f32 %v213, %v228
  %232 = vrot.lane.b32.xlu0 %v230, 64
  %v233 = vpop.permute.xlu0 %232
  %v235 = vadd.f32 %v81, %v233
  %v236 = vtanh.pop %v235
  %v237 = vsub.f32 1.0, %v224
  %239 = vrot.lane.b32.xlu0 %v236, 96
  %v240 = vpop.permute.xlu0 %239
  %v242 = vmul.f32 %v237, %v240
  %v243 = vmul.f32 %v224, %v82
  %v244 = vadd.f32 %v242, %v243
  %246 = vrot.lane.b32.xlu0 %v202, 96
  %v247 = vpop.permute.xlu0 %246
  %vm249 = vcmask 261120
  %250 = vst.msk [vmem:[#allocation2] sm:$0xff] %vm249, %v247
  %vm251 = vcmask 523520
  %252 = vst.msk [vmem:[#allocation2] sm:$0xff] %vm251, %v244
  %253 = vst.msk [vmem:[%s4] sm:$0xff] %vm249, %v247
  %255 = vrot.lane.b32.xlu0 %v244, 96
  %v256 = vpop.permute.xlu0 %255
  %s258 = scalar_lea.vmem %s52, 56
  %259 = vst.msk [vmem:[%s258] sm:$0xff] %vm249, %v256
  %s260 = scalar_lea.vmem %s0, 4
  %v261 = vld [vmem:[%s260] sm:$0xf]
  %v262 = vunpack.c.l.bf16 %v261
  %s263 = scalar_lea.vmem %s44, 24
  %v264 = vld [vmem:[%s263] sm:$0xf]
  %v265 = vunpack.c.l.bf16 %v264
  %v266 = vld [vmem:[#allocation2] sm:$0xff]
  %v267 = vpack.c.bf16 %v266, %v266
  %v269 = vsel %vm124, %v267, 0
  %271 = vmatprep.subr.bf16.mxu0 %v109
  %272 = vmatpush1.bf16.msra.mxu0 %v108
  %273 = vmatprep.subr.bf16.mxu0 %v111
  %274 = vmatpush1.bf16.msra.mxu0 %v110
  %275 = vmatprep.subr.bf16.mxu0 %v113
  %276 = vmatpush1.bf16.msra.mxu0 %v112
  %277 = vmatprep.subr.bf16.mxu0 %v115
  %278 = vmatpush1.bf16.msra.mxu0 %v114
  %279 = vmatprep.subr.bf16.mxu0 0
  %280 = vmatpush1.bf16.msra.mxu0 0
  %281 = vmatprep.subr.bf16.mxu0 0
  %282 = vmatpush1.bf16.msra.mxu0 0
  %283 = vmatprep.subr.bf16.mxu0 0
  %284 = vmatpush1.bf16.msra.mxu0 0
  %285 = vmatprep.subr.bf16.mxu0 0
  %286 = vmatpush1.bf16.msra.mxu0 0
  %287 = vmatprep.subr.bf16.mxu0 0
  %288 = vmatpush1.bf16.msra.mxu0 0
  %289 = vmatprep.subr.bf16.mxu0 0
  %290 = vmatpush1.bf16.msra.mxu0 0
  %291 = vmatprep.subr.bf16.mxu0 0
  %292 = vmatpush1.bf16.msra.mxu0 0
  %293 = vmatprep.subr.bf16.mxu0 0
  %294 = vmatpush1.bf16.msra.mxu0 0
  %295 = vmatprep.subr.bf16.mxu0 0
  %296 = vmatpush1.bf16.msra.mxu0 0
  %297 = vmatprep.subr.bf16.mxu0 0
  %298 = vmatpush1.bf16.msra.mxu0 0
  %299 = vmatprep.subr.bf16.mxu0 0
  %300 = vmatpush1.bf16.msra.mxu0 0
  %301 = vmatprep.subr.bf16.mxu0 0
  %302 = vmatpush1.bf16.msra.mxu0 0
  %303 = vmatprep.mubr.bf16.mxu0 0
  %304 = vmatmul.mubr.bf16.gmra.mrb[0].mxu0 %v269
  %v305 = vpop.f32.mrb[0].mxu0
  %v306 = vadd.f32 0.0, %v305
  %v307 = vpop.f32.mrb[0].mxu0
  %v308 = vadd.f32 0.0, %v307
  %v309 = vpop.f32.mrb[0].mxu0
  %v310 = vpop.f32.mrb[0].mxu0
  %311 = vdwg.mxu0
  %v312 = vadd.f32 %v262, %v306
  %v313 = vxor.u32 %v312, 2147483648
  %v314 = vmul.f32 %v313, 1.442695
  %v315 = vpow.pop %v314
  %v316 = vadd.f32 %v315, 1.0
  %v317 = vrcp.pop %v316
  %v318 = vmul.f32 1.0, %v317
  %v319 = vadd.f32 %v306, %v177
  %321 = vrot.lane.b32.xlu0 %v319, 64
  %v322 = vpop.permute.xlu0 %321
  %v324 = vmul.f32 %v318, %v322
  %326 = vrot.lane.b32.xlu0 %v324, 64
  %v327 = vpop.permute.xlu0 %326
  %v329 = vadd.f32 %v262, %v327
  %v330 = vtanh.pop %v329
  %v331 = vsub.f32 1.0, %v318
  %333 = vrot.lane.b32.xlu0 %v330, 96
  %v334 = vpop.permute.xlu0 %333
  %v336 = vmul.f32 %v331, %v334
  %338 = vrot.lane.b32.xlu0 %v266, 32
  %v339 = vpop.permute.xlu0 %338
  %v341 = vmul.f32 %v318, %v339
  %v342 = vadd.f32 %v336, %v341
  %344 = vrot.lane.b32.xlu0 %v306, 32
  %v345 = vpop.permute.xlu0 %344
  %v347 = vadd.f32 %v265, %v345
  %v348 = vxor.u32 %v347, 2147483648
  %v349 = vmul.f32 %v348, 1.442695
  %v350 = vpow.pop %v349
  %v351 = vadd.f32 %v350, 1.0
  %v352 = vrcp.pop %v351
  %v353 = vmul.f32 1.0, %v352
  %355 = vrot.lane.b32.xlu0 %v308, 32
  %v356 = vpop.permute.xlu0 %355
  %v358 = vadd.f32 %v265, %v356
  %v359 = vxor.u32 %v358, 2147483648
  %v360 = vmul.f32 %v359, 1.442695
  %v361 = vpow.pop %v360
  %v362 = vadd.f32 %v361, 1.0
  %v363 = vrcp.pop %v362
  %v364 = vmul.f32 1.0, %v363
  %v365 = vadd.f32 %v308, %v75
  %367 = vrot.lane.b32.xlu0 %v365, 96
  %v368 = vpop.permute.xlu0 %367
  %v370 = vmul.f32 %v353, %v368
  %372 = vrot.lane.b32.xlu0 %v370, 64
  %v373 = vpop.permute.xlu0 %372
  %v375 = vadd.f32 %v265, %v373
  %v376 = vtanh.pop %v375
  %v377 = vsub.f32 1.0, %v364
  %379 = vrot.lane.b32.xlu0 %v376, 96
  %v380 = vpop.permute.xlu0 %379
  %v382 = vmul.f32 %v377, %v380
  %v383 = vmul.f32 %v364, %v266
  %v384 = vadd.f32 %v382, %v383
  %386 = vrot.lane.b32.xlu0 %v342, 96
  %v387 = vpop.permute.xlu0 %386
  %389 = vst.msk [vmem:[#allocation2] sm:$0xff] %vm249, %v387
  %390 = vst.msk [vmem:[#allocation2] sm:$0xff] %vm251, %v384
  %s391 = scalar_lea.vmem %s4, 8
  %392 = vst.msk [vmem:[%s391] sm:$0xff] %vm249, %v387
  %394 = vrot.lane.b32.xlu0 %v384, 96
  %v395 = vpop.permute.xlu0 %394
  %s397 = scalar_lea.vmem %s52, 48
  %398 = vst.msk [vmem:[%s397] sm:$0xff] %vm249, %v395
  %s399 = scalar_lea.vmem %s0, 8
  %v400 = vld [vmem:[%s399] sm:$0xf]
  %v401 = vunpack.c.l.bf16 %v400
  %s402 = scalar_lea.vmem %s44, 20
  %v403 = vld [vmem:[%s402] sm:$0xf]
  %v404 = vunpack.c.l.bf16 %v403
  %v405 = vld [vmem:[#allocation2] sm:$0xff]
  %v406 = vpack.c.bf16 %v405, %v405
  %v408 = vsel %vm124, %v406, 0
  %410 = vmatprep.subr.bf16.mxu0 %v109
  %411 = vmatpush1.bf16.msra.mxu0 %v108
  %412 = vmatprep.subr.bf16.mxu0 %v111
  %413 = vmatpush1.bf16.msra.mxu0 %v110
  %414 = vmatprep.subr.bf16.mxu0 %v113
  %415 = vmatpush1.bf16.msra.mxu0 %v112
  %416 = vmatprep.subr.bf16.mxu0 %v115
  %417 = vmatpush1.bf16.msra.mxu0 %v114
  %418 = vmatprep.subr.bf16.mxu0 0
  %419 = vmatpush1.bf16.msra.mxu0 0
  %420 = vmatprep.subr.bf16.mxu0 0
  %421 = vmatpush1.bf16.msra.mxu0 0
  %422 = vmatprep.subr.bf16.mxu0 0
  %423 = vmatpush1.bf16.msra.mxu0 0
  %424 = vmatprep.subr.bf16.mxu0 0
  %425 = vmatpush1.bf16.msra.mxu0 0
  %426 = vmatprep.subr.bf16.mxu0 0
  %427 = vmatpush1.bf16.msra.mxu0 0
  %428 = vmatprep.subr.bf16.mxu0 0
  %429 = vmatpush1.bf16.msra.mxu0 0
  %430 = vmatprep.subr.bf16.mxu0 0
  %431 = vmatpush1.bf16.msra.mxu0 0
  %432 = vmatprep.subr.bf16.mxu0 0
  %433 = vmatpush1.bf16.msra.mxu0 0
  %434 = vmatprep.subr.bf16.mxu0 0
  %435 = vmatpush1.bf16.msra.mxu0 0
  %436 = vmatprep.subr.bf16.mxu0 0
  %437 = vmatpush1.bf16.msra.mxu0 0
  %438 = vmatprep.subr.bf16.mxu0 0
  %439 = vmatpush1.bf16.msra.mxu0 0
  %440 = vmatprep.subr.bf16.mxu0 0
  %441 = vmatpush1.bf16.msra.mxu0 0
  %442 = vmatprep.mubr.bf16.mxu0 0
  %443 = vmatmul.mubr.bf16.gmra.mrb[0].mxu0 %v408
  %v444 = vpop.f32.mrb[0].mxu0
  %v445 = vadd.f32 0.0, %v444
  %v446 = vpop.f32.mrb[0].mxu0
  %v447 = vadd.f32 0.0, %v446
  %v448 = vpop.f32.mrb[0].mxu0
  %v449 = vpop.f32.mrb[0].mxu0
  %450 = vdwg.mxu0
  %v451 = vadd.f32 %v401, %v445
  %v452 = vxor.u32 %v451, 2147483648
  %v453 = vmul.f32 %v452, 1.442695
  %v454 = vpow.pop %v453
  %v455 = vadd.f32 %v454, 1.0
  %v456 = vrcp.pop %v455
  %v457 = vmul.f32 1.0, %v456
  %v458 = vadd.f32 %v445, %v177
  %460 = vrot.lane.b32.xlu0 %v458, 64
  %v461 = vpop.permute.xlu0 %460
  %v463 = vmul.f32 %v457, %v461
  %465 = vrot.lane.b32.xlu0 %v463, 64
  %v466 = vpop.permute.xlu0 %465
  %v468 = vadd.f32 %v401, %v466
  %v469 = vtanh.pop %v468
  %v470 = vsub.f32 1.0, %v457
  %472 = vrot.lane.b32.xlu0 %v469, 96
  %v473 = vpop.permute.xlu0 %472
  %v475 = vmul.f32 %v470, %v473
  %477 = vrot.lane.b32.xlu0 %v405, 32
  %v478 = vpop.permute.xlu0 %477
  %v480 = vmul.f32 %v457, %v478
  %v481 = vadd.f32 %v475, %v480
  %483 = vrot.lane.b32.xlu0 %v445, 32
  %v484 = vpop.permute.xlu0 %483
  %v486 = vadd.f32 %v404, %v484
  %v487 = vxor.u32 %v486, 2147483648
  %v488 = vmul.f32 %v487, 1.442695
  %v489 = vpow.pop %v488
  %v490 = vadd.f32 %v489, 1.0
  %v491 = vrcp.pop %v490
  %v492 = vmul.f32 1.0, %v491
  %494 = vrot.lane.b32.xlu0 %v447, 32
  %v495 = vpop.permute.xlu0 %494
  %v497 = vadd.f32 %v404, %v495
  %v498 = vxor.u32 %v497, 2147483648
  %v499 = vmul.f32 %v498, 1.442695
  %v500 = vpow.pop %v499
  %v501 = vadd.f32 %v500, 1.0
  %v502 = vrcp.pop %v501
  %v503 = vmul.f32 1.0, %v502
  %v504 = vadd.f32 %v447, %v75
  %506 = vrot.lane.b32.xlu0 %v504, 96
  %v507 = vpop.permute.xlu0 %506
  %v509 = vmul.f32 %v492, %v507
  %511 = vrot.lane.b32.xlu0 %v509, 64
  %v512 = vpop.permute.xlu0 %511
  %v514 = vadd.f32 %v404, %v512
  %v515 = vtanh.pop %v514
  %v516 = vsub.f32 1.0, %v503
  %518 = vrot.lane.b32.xlu0 %v515, 96
  %v519 = vpop.permute.xlu0 %518
  %v521 = vmul.f32 %v516, %v519
  %v522 = vmul.f32 %v503, %v405
  %v523 = vadd.f32 %v521, %v522
  %525 = vrot.lane.b32.xlu0 %v481, 96
  %v526 = vpop.permute.xlu0 %525
  %528 = vst.msk [vmem:[#allocation2] sm:$0xff] %vm249, %v526
  %529 = vst.msk [vmem:[#allocation2] sm:$0xff] %vm251, %v523
  %s530 = scalar_lea.vmem %s4, 16
  %531 = vst.msk [vmem:[%s530] sm:$0xff] %vm249, %v526
  %533 = vrot.lane.b32.xlu0 %v523, 96
  %v534 = vpop.permute.xlu0 %533
  %s536 = scalar_lea.vmem %s52, 40
  %537 = vst.msk [vmem:[%s536] sm:$0xff] %vm249, %v534
  %s538 = scalar_lea.vmem %s0, 12
  %v539 = vld [vmem:[%s538] sm:$0xf]
  %v540 = vunpack.c.l.bf16 %v539
  %s541 = scalar_lea.vmem %s44, 16
  %v542 = vld [vmem:[%s541] sm:$0xf]
  %v543 = vunpack.c.l.bf16 %v542
  %v544 = vld [vmem:[#allocation2] sm:$0xff]
  %v545 = vpack.c.bf16 %v544, %v544
  %v547 = vsel %vm124, %v545, 0
  %549 = vmatprep.subr.bf16.mxu0 %v109
  %550 = vmatpush1.bf16.msra.mxu0 %v108
  %551 = vmatprep.subr.bf16.mxu0 %v111
  %552 = vmatpush1.bf16.msra.mxu0 %v110
  %553 = vmatprep.subr.bf16.mxu0 %v113
  %554 = vmatpush1.bf16.msra.mxu0 %v112
  %555 = vmatprep.subr.bf16.mxu0 %v115
  %556 = vmatpush1.bf16.msra.mxu0 %v114
  %557 = vmatprep.subr.bf16.mxu0 0
  %558 = vmatpush1.bf16.msra.mxu0 0
  %559 = vmatprep.subr.bf16.mxu0 0
  %560 = vmatpush1.bf16.msra.mxu0 0
  %561 = vmatprep.subr.bf16.mxu0 0
  %562 = vmatpush1.bf16.msra.mxu0 0
  %563 = vmatprep.subr.bf16.mxu0 0
  %564 = vmatpush1.bf16.msra.mxu0 0
  %565 = vmatprep.subr.bf16.mxu0 0
  %566 = vmatpush1.bf16.msra.mxu0 0
  %567 = vmatprep.subr.bf16.mxu0 0
  %568 = vmatpush1.bf16.msra.mxu0 0
  %569 = vmatprep.subr.bf16.mxu0 0
  %570 = vmatpush1.bf16.msra.mxu0 0
  %571 = vmatprep.subr.bf16.mxu0 0
  %572 = vmatpush1.bf16.msra.mxu0 0
  %573 = vmatprep.subr.bf16.mxu0 0
  %574 = vmatpush1.bf16.msra.mxu0 0
  %575 = vmatprep.subr.bf16.mxu0 0
  %576 = vmatpush1.bf16.msra.mxu0 0
  %577 = vmatprep.subr.bf16.mxu0 0
  %578 = vmatpush1.bf16.msra.mxu0 0
  %579 = vmatprep.subr.bf16.mxu0 0
  %580 = vmatpush1.bf16.msra.mxu0 0
  %581 = vmatprep.mubr.bf16.mxu0 0
  %582 = vmatmul.mubr.bf16.gmra.mrb[0].mxu0 %v547
  %v583 = vpop.f32.mrb[0].mxu0
  %v584 = vadd.f32 0.0, %v583
  %v585 = vpop.f32.mrb[0].mxu0
  %v586 = vadd.f32 0.0, %v585
  %v587 = vpop.f32.mrb[0].mxu0
  %v588 = vpop.f32.mrb[0].mxu0
  %589 = vdwg.mxu0
  %v590 = vadd.f32 %v540, %v584
  %v591 = vxor.u32 %v590, 2147483648
  %v592 = vmul.f32 %v591, 1.442695
  %v593 = vpow.pop %v592
  %v594 = vadd.f32 %v593, 1.0
  %v595 = vrcp.pop %v594
  %v596 = vmul.f32 1.0, %v595
  %v597 = vadd.f32 %v584, %v177
  %599 = vrot.lane.b32.xlu0 %v597, 64
  %v600 = vpop.permute.xlu0 %599
  %v602 = vmul.f32 %v596, %v600
  %604 = vrot.lane.b32.xlu0 %v602, 64
  %v605 = vpop.permute.xlu0 %604
  %v607 = vadd.f32 %v540, %v605
  %v608 = vtanh.pop %v607
  %v609 = vsub.f32 1.0, %v596
  %611 = vrot.lane.b32.xlu0 %v608, 96
  %v612 = vpop.permute.xlu0 %611
  %v614 = vmul.f32 %v609, %v612
  %616 = vrot.lane.b32.xlu0 %v544, 32
  %v617 = vpop.permute.xlu0 %616
  %v619 = vmul.f32 %v596, %v617
  %v620 = vadd.f32 %v614, %v619
  %622 = vrot.lane.b32.xlu0 %v584, 32
  %v623 = vpop.permute.xlu0 %622
  %v625 = vadd.f32 %v543, %v623
  %v626 = vxor.u32 %v625, 2147483648
  %v627 = vmul.f32 %v626, 1.442695
  %v628 = vpow.pop %v627
  %v629 = vadd.f32 %v628, 1.0
  %v630 = vrcp.pop %v629
  %v631 = vmul.f32 1.0, %v630
  %633 = vrot.lane.b32.xlu0 %v586, 32
  %v634 = vpop.permute.xlu0 %633
  %v636 = vadd.f32 %v543, %v634
  %v637 = vxor.u32 %v636, 2147483648
  %v638 = vmul.f32 %v637, 1.442695
  %v639 = vpow.pop %v638
  %v640 = vadd.f32 %v639, 1.0
  %v641 = vrcp.pop %v640
  %v642 = vmul.f32 1.0, %v641
  %v643 = vadd.f32 %v586, %v75
  %645 = vrot.lane.b32.xlu0 %v643, 96
  %v646 = vpop.permute.xlu0 %645
  %v648 = vmul.f32 %v631, %v646
  %650 = vrot.lane.b32.xlu0 %v648, 64
  %v651 = vpop.permute.xlu0 %650
  %v653 = vadd.f32 %v543, %v651
  %v654 = vtanh.pop %v653
  %v655 = vsub.f32 1.0, %v642
  %657 = vrot.lane.b32.xlu0 %v654, 96
  %v658 = vpop.permute.xlu0 %657
  %v660 = vmul.f32 %v655, %v658
  %v661 = vmul.f32 %v642, %v544
  %v662 = vadd.f32 %v660, %v661
  %664 = vrot.lane.b32.xlu0 %v620, 96
  %v665 = vpop.permute.xlu0 %664
  %667 = vst.msk [vmem:[#allocation2] sm:$0xff] %vm249, %v665
  %668 = vst.msk [vmem:[#allocation2] sm:$0xff] %vm251, %v662
  %s669 = scalar_lea.vmem %s4, 24
  %670 = vst.msk [vmem:[%s669] sm:$0xff] %vm249, %v665
  %672 = vrot.lane.b32.xlu0 %v662, 96
  %v673 = vpop.permute.xlu0 %672
  %s675 = scalar_lea.vmem %s52, 32
  %676 = vst.msk [vmem:[%s675] sm:$0xff] %vm249, %v673
  %s677 = scalar_lea.vmem %s0, 16
  %v678 = vld [vmem:[%s677] sm:$0xf]
  %v679 = vunpack.c.l.bf16 %v678
  %s680 = scalar_lea.vmem %s44, 12
  %v681 = vld [vmem:[%s680] sm:$0xf]
  %v682 = vunpack.c.l.bf16 %v681
  %v683 = vld [vmem:[#allocation2] sm:$0xff]
  %v684 = vpack.c.bf16 %v683, %v683
  %v686 = vsel %vm124, %v684, 0
  %688 = vmatprep.subr.bf16.mxu0 %v109
  %689 = vmatpush1.bf16.msra.mxu0 %v108
  %690 = vmatprep.subr.bf16.mxu0 %v111
  %691 = vmatpush1.bf16.msra.mxu0 %v110
  %692 = vmatprep.subr.bf16.mxu0 %v113
  %693 = vmatpush1.bf16.msra.mxu0 %v112
  %694 = vmatprep.subr.bf16.mxu0 %v115
  %695 = vmatpush1.bf16.msra.mxu0 %v114
  %696 = vmatprep.subr.bf16.mxu0 0
  %697 = vmatpush1.bf16.msra.mxu0 0
  %698 = vmatprep.subr.bf16.mxu0 0
  %699 = vmatpush1.bf16.msra.mxu0 0
  %700 = vmatprep.subr.bf16.mxu0 0
  %701 = vmatpush1.bf16.msra.mxu0 0
  %702 = vmatprep.subr.bf16.mxu0 0
  %703 = vmatpush1.bf16.msra.mxu0 0
  %704 = vmatprep.subr.bf16.mxu0 0
  %705 = vmatpush1.bf16.msra.mxu0 0
  %706 = vmatprep.subr.bf16.mxu0 0
  %707 = vmatpush1.bf16.msra.mxu0 0
  %708 = vmatprep.subr.bf16.mxu0 0
  %709 = vmatpush1.bf16.msra.mxu0 0
  %710 = vmatprep.subr.bf16.mxu0 0
  %711 = vmatpush1.bf16.msra.mxu0 0
  %712 = vmatprep.subr.bf16.mxu0 0
  %713 = vmatpush1.bf16.msra.mxu0 0
  %714 = vmatprep.subr.bf16.mxu0 0
  %715 = vmatpush1.bf16.msra.mxu0 0
  %716 = vmatprep.subr.bf16.mxu0 0
  %717 = vmatpush1.bf16.msra.mxu0 0
  %718 = vmatprep.subr.bf16.mxu0 0
  %719 = vmatpush1.bf16.msra.mxu0 0
  %720 = vmatprep.mubr.bf16.mxu0 0
  %721 = vmatmul.mubr.bf16.gmra.mrb[0].mxu0 %v686
  %v722 = vpop.f32.mrb[0].mxu0
  %v723 = vadd.f32 0.0, %v722
  %v724 = vpop.f32.mrb[0].mxu0
  %v725 = vadd.f32 0.0, %v724
  %v726 = vpop.f32.mrb[0].mxu0
  %v727 = vpop.f32.mrb[0].mxu0
  %728 = vdwg.mxu0
  %v729 = vadd.f32 %v679, %v723
  %v730 = vxor.u32 %v729, 2147483648
  %v731 = vmul.f32 %v730, 1.442695
  %v732 = vpow.pop %v731
  %v733 = vadd.f32 %v732, 1.0
  %v734 = vrcp.pop %v733
  %v735 = vmul.f32 1.0, %v734
  %v736 = vadd.f32 %v723, %v177
  %738 = vrot.lane.b32.xlu0 %v736, 64
  %v739 = vpop.permute.xlu0 %738
  %v741 = vmul.f32 %v735, %v739
  %743 = vrot.lane.b32.xlu0 %v741, 64
  %v744 = vpop.permute.xlu0 %743
  %v746 = vadd.f32 %v679, %v744
  %v747 = vtanh.pop %v746
  %v748 = vsub.f32 1.0, %v735
  %750 = vrot.lane.b32.xlu0 %v747, 96
  %v751 = vpop.permute.xlu0 %750
  %v753 = vmul.f32 %v748, %v751
  %755 = vrot.lane.b32.xlu0 %v683, 32
  %v756 = vpop.permute.xlu0 %755
  %v758 = vmul.f32 %v735, %v756
  %v759 = vadd.f32 %v753, %v758
  %761 = vrot.lane.b32.xlu0 %v723, 32
  %v762 = vpop.permute.xlu0 %761
  %v764 = vadd.f32 %v682, %v762
  %v765 = vxor.u32 %v764, 2147483648
  %v766 = vmul.f32 %v765, 1.442695
  %v767 = vpow.pop %v766
  %v768 = vadd.f32 %v767, 1.0
  %v769 = vrcp.pop %v768
  %v770 = vmul.f32 1.0, %v769
  %772 = vrot.lane.b32.xlu0 %v725, 32
  %v773 = vpop.permute.xlu0 %772
  %v775 = vadd.f32 %v682, %v773
  %v776 = vxor.u32 %v775, 2147483648
  %v777 = vmul.f32 %v776, 1.442695
  %v778 = vpow.pop %v777
  %v779 = vadd.f32 %v778, 1.0
  %v780 = vrcp.pop %v779
  %v781 = vmul.f32 1.0, %v780
  %v782 = vadd.f32 %v725, %v75
  %784 = vrot.lane.b32.xlu0 %v782, 96
  %v785 = vpop.permute.xlu0 %784
  %v787 = vmul.f32 %v770, %v785
  %789 = vrot.lane.b32.xlu0 %v787, 64
  %v790 = vpop.permute.xlu0 %789
  %v792 = vadd.f32 %v682, %v790
  %v793 = vtanh.pop %v792
  %v794 = vsub.f32 1.0, %v781
  %796 = vrot.lane.b32.xlu0 %v793, 96
  %v797 = vpop.permute.xlu0 %796
  %v799 = vmul.f32 %v794, %v797
  %v800 = vmul.f32 %v781, %v683
  %v801 = vadd.f32 %v799, %v800
  %803 = vrot.lane.b32.xlu0 %v759, 96
  %v804 = vpop.permute.xlu0 %803
  %806 = vst.msk [vmem:[#allocation2] sm:$0xff] %vm249, %v804
  %807 = vst.msk [vmem:[#allocation2] sm:$0xff] %vm251, %v801
  %s808 = scalar_lea.vmem %s4, 32
  %809 = vst.msk [vmem:[%s808] sm:$0xff] %vm249, %v804
  %811 = vrot.lane.b32.xlu0 %v801, 96
  %v812 = vpop.permute.xlu0 %811
  %s814 = scalar_lea.vmem %s52, 24
  %815 = vst.msk [vmem:[%s814] sm:$0xff] %vm249, %v812
  %s816 = scalar_lea.vmem %s0, 20
  %v817 = vld [vmem:[%s816] sm:$0xf]
  %v818 = vunpack.c.l.bf16 %v817
  %s819 = scalar_lea.vmem %s44, 8
  %v820 = vld [vmem:[%s819] sm:$0xf]
  %v821 = vunpack.c.l.bf16 %v820
  %v822 = vld [vmem:[#allocation2] sm:$0xff]
  %v823 = vpack.c.bf16 %v822, %v822
  %v825 = vsel %vm124, %v823, 0
  %827 = vmatprep.subr.bf16.mxu0 %v109
  %828 = vmatpush1.bf16.msra.mxu0 %v108
  %829 = vmatprep.subr.bf16.mxu0 %v111
  %830 = vmatpush1.bf16.msra.mxu0 %v110
  %831 = vmatprep.subr.bf16.mxu0 %v113
  %832 = vmatpush1.bf16.msra.mxu0 %v112
  %833 = vmatprep.subr.bf16.mxu0 %v115
  %834 = vmatpush1.bf16.msra.mxu0 %v114
  %835 = vmatprep.subr.bf16.mxu0 0
  %836 = vmatpush1.bf16.msra.mxu0 0
  %837 = vmatprep.subr.bf16.mxu0 0
  %838 = vmatpush1.bf16.msra.mxu0 0
  %839 = vmatprep.subr.bf16.mxu0 0
  %840 = vmatpush1.bf16.msra.mxu0 0
  %841 = vmatprep.subr.bf16.mxu0 0
  %842 = vmatpush1.bf16.msra.mxu0 0
  %843 = vmatprep.subr.bf16.mxu0 0
  %844 = vmatpush1.bf16.msra.mxu0 0
  %845 = vmatprep.subr.bf16.mxu0 0
  %846 = vmatpush1.bf16.msra.mxu0 0
  %847 = vmatprep.subr.bf16.mxu0 0
  %848 = vmatpush1.bf16.msra.mxu0 0
  %849 = vmatprep.subr.bf16.mxu0 0
  %850 = vmatpush1.bf16.msra.mxu0 0
  %851 = vmatprep.subr.bf16.mxu0 0
  %852 = vmatpush1.bf16.msra.mxu0 0
  %853 = vmatprep.subr.bf16.mxu0 0
  %854 = vmatpush1.bf16.msra.mxu0 0
  %855 = vmatprep.subr.bf16.mxu0 0
  %856 = vmatpush1.bf16.msra.mxu0 0
  %857 = vmatprep.subr.bf16.mxu0 0
  %858 = vmatpush1.bf16.msra.mxu0 0
  %859 = vmatprep.mubr.bf16.mxu0 0
  %860 = vmatmul.mubr.bf16.gmra.mrb[0].mxu0 %v825
  %v861 = vpop.f32.mrb[0].mxu0
  %v862 = vadd.f32 0.0, %v861
  %v863 = vpop.f32.mrb[0].mxu0
  %v864 = vadd.f32 0.0, %v863
  %v865 = vpop.f32.mrb[0].mxu0
  %v866 = vpop.f32.mrb[0].mxu0
  %867 = vdwg.mxu0
  %v868 = vadd.f32 %v818, %v862
  %v869 = vxor.u32 %v868, 2147483648
  %v870 = vmul.f32 %v869, 1.442695
  %v871 = vpow.pop %v870
  %v872 = vadd.f32 %v871, 1.0
  %v873 = vrcp.pop %v872
  %v874 = vmul.f32 1.0, %v873
  %v875 = vadd.f32 %v862, %v177
  %877 = vrot.lane.b32.xlu0 %v875, 64
  %v878 = vpop.permute.xlu0 %877
  %v880 = vmul.f32 %v874, %v878
  %882 = vrot.lane.b32.xlu0 %v880, 64
  %v883 = vpop.permute.xlu0 %882
  %v885 = vadd.f32 %v818, %v883
  %v886 = vtanh.pop %v885
  %v887 = vsub.f32 1.0, %v874
  %889 = vrot.lane.b32.xlu0 %v886, 96
  %v890 = vpop.permute.xlu0 %889
  %v892 = vmul.f32 %v887, %v890
  %894 = vrot.lane.b32.xlu0 %v822, 32
  %v895 = vpop.permute.xlu0 %894
  %v897 = vmul.f32 %v874, %v895
  %v898 = vadd.f32 %v892, %v897
  %900 = vrot.lane.b32.xlu0 %v862, 32
  %v901 = vpop.permute.xlu0 %900
  %v903 = vadd.f32 %v821, %v901
  %v904 = vxor.u32 %v903, 2147483648
  %v905 = vmul.f32 %v904, 1.442695
  %v906 = vpow.pop %v905
  %v907 = vadd.f32 %v906, 1.0
  %v908 = vrcp.pop %v907
  %v909 = vmul.f32 1.0, %v908
  %911 = vrot.lane.b32.xlu0 %v864, 32
  %v912 = vpop.permute.xlu0 %911
  %v914 = vadd.f32 %v821, %v912
  %v915 = vxor.u32 %v914, 2147483648
  %v916 = vmul.f32 %v915, 1.442695
  %v917 = vpow.pop %v916
  %v918 = vadd.f32 %v917, 1.0
  %v919 = vrcp.pop %v918
  %v920 = vmul.f32 1.0, %v919
  %v921 = vadd.f32 %v864, %v75
  %923 = vrot.lane.b32.xlu0 %v921, 96
  %v924 = vpop.permute.xlu0 %923
  %v926 = vmul.f32 %v909, %v924
  %928 = vrot.lane.b32.xlu0 %v926, 64
  %v929 = vpop.permute.xlu0 %928
  %v931 = vadd.f32 %v821, %v929
  %v932 = vtanh.pop %v931
  %v933 = vsub.f32 1.0, %v920
  %935 = vrot.lane.b32.xlu0 %v932, 96
  %v936 = vpop.permute.xlu0 %935
  %v938 = vmul.f32 %v933, %v936
  %v939 = vmul.f32 %v920, %v822
  %v940 = vadd.f32 %v938, %v939
  %942 = vrot.lane.b32.xlu0 %v898, 96
  %v943 = vpop.permute.xlu0 %942
  %945 = vst.msk [vmem:[#allocation2] sm:$0xff] %vm249, %v943
  %946 = vst.msk [vmem:[#allocation2] sm:$0xff] %vm251, %v940
  %s947 = scalar_lea.vmem %s4, 40
  %948 = vst.msk [vmem:[%s947] sm:$0xff] %vm249, %v943
  %950 = vrot.lane.b32.xlu0 %v940, 96
  %v951 = vpop.permute.xlu0 %950
  %s953 = scalar_lea.vmem %s52, 16
  %954 = vst.msk [vmem:[%s953] sm:$0xff] %vm249, %v951
  %s955 = scalar_lea.vmem %s0, 24
  %v956 = vld [vmem:[%s955] sm:$0xf]
  %v957 = vunpack.c.l.bf16 %v956
  %s958 = scalar_lea.vmem %s44, 4
  %v959 = vld [vmem:[%s958] sm:$0xf]
  %v960 = vunpack.c.l.bf16 %v959
  %v961 = vld [vmem:[#allocation2] sm:$0xff]
  %v962 = vpack.c.bf16 %v961, %v961
  %v964 = vsel %vm124, %v962, 0
  %966 = vmatprep.subr.bf16.mxu0 %v109
  %967 = vmatpush1.bf16.msra.mxu0 %v108
  %968 = vmatprep.subr.bf16.mxu0 %v111
  %969 = vmatpush1.bf16.msra.mxu0 %v110
  %970 = vmatprep.subr.bf16.mxu0 %v113
  %971 = vmatpush1.bf16.msra.mxu0 %v112
  %972 = vmatprep.subr.bf16.mxu0 %v115
  %973 = vmatpush1.bf16.msra.mxu0 %v114
  %974 = vmatprep.subr.bf16.mxu0 0
  %975 = vmatpush1.bf16.msra.mxu0 0
  %976 = vmatprep.subr.bf16.mxu0 0
  %977 = vmatpush1.bf16.msra.mxu0 0
  %978 = vmatprep.subr.bf16.mxu0 0
  %979 = vmatpush1.bf16.msra.mxu0 0
  %980 = vmatprep.subr.bf16.mxu0 0
  %981 = vmatpush1.bf16.msra.mxu0 0
  %982 = vmatprep.subr.bf16.mxu0 0
  %983 = vmatpush1.bf16.msra.mxu0 0
  %984 = vmatprep.subr.bf16.mxu0 0
  %985 = vmatpush1.bf16.msra.mxu0 0
  %986 = vmatprep.subr.bf16.mxu0 0
  %987 = vmatpush1.bf16.msra.mxu0 0
  %988 = vmatprep.subr.bf16.mxu0 0
  %989 = vmatpush1.bf16.msra.mxu0 0
  %990 = vmatprep.subr.bf16.mxu0 0
  %991 = vmatpush1.bf16.msra.mxu0 0
  %992 = vmatprep.subr.bf16.mxu0 0
  %993 = vmatpush1.bf16.msra.mxu0 0
  %994 = vmatprep.subr.bf16.mxu0 0
  %995 = vmatpush1.bf16.msra.mxu0 0
  %996 = vmatprep.subr.bf16.mxu0 0
  %997 = vmatpush1.bf16.msra.mxu0 0
  %998 = vmatprep.mubr.bf16.mxu0 0
  %999 = vmatmul.mubr.bf16.gmra.mrb[0].mxu0 %v964
  %v1000 = vpop.f32.mrb[0].mxu0
  %v1001 = vadd.f32 0.0, %v1000
  %v1002 = vpop.f32.mrb[0].mxu0
  %v1003 = vadd.f32 0.0, %v1002
  %v1004 = vpop.f32.mrb[0].mxu0
  %v1005 = vpop.f32.mrb[0].mxu0
  %1006 = vdwg.mxu0
  %v1007 = vadd.f32 %v957, %v1001
  %v1008 = vxor.u32 %v1007, 2147483648
  %v1009 = vmul.f32 %v1008, 1.442695
  %v1010 = vpow.pop %v1009
  %v1011 = vadd.f32 %v1010, 1.0
  %v1012 = vrcp.pop %v1011
  %v1013 = vmul.f32 1.0, %v1012
  %v1014 = vadd.f32 %v1001, %v177
  %1016 = vrot.lane.b32.xlu0 %v1014, 64
  %v1017 = vpop.permute.xlu0 %1016
  %v1019 = vmul.f32 %v1013, %v1017
  %1021 = vrot.lane.b32.xlu0 %v1019, 64
  %v1022 = vpop.permute.xlu0 %1021
  %v1024 = vadd.f32 %v957, %v1022
  %v1025 = vtanh.pop %v1024
  %v1026 = vsub.f32 1.0, %v1013
  %1028 = vrot.lane.b32.xlu0 %v1025, 96
  %v1029 = vpop.permute.xlu0 %1028
  %v1031 = vmul.f32 %v1026, %v1029
  %1033 = vrot.lane.b32.xlu0 %v961, 32
  %v1034 = vpop.permute.xlu0 %1033
  %v1036 = vmul.f32 %v1013, %v1034
  %v1037 = vadd.f32 %v1031, %v1036
  %1039 = vrot.lane.b32.xlu0 %v1001, 32
  %v1040 = vpop.permute.xlu0 %1039
  %v1042 = vadd.f32 %v960, %v1040
  %v1043 = vxor.u32 %v1042, 2147483648
  %v1044 = vmul.f32 %v1043, 1.442695
  %v1045 = vpow.pop %v1044
  %v1046 = vadd.f32 %v1045, 1.0
  %v1047 = vrcp.pop %v1046
  %v1048 = vmul.f32 1.0, %v1047
  %1050 = vrot.lane.b32.xlu0 %v1003, 32
  %v1051 = vpop.permute.xlu0 %1050
  %v1053 = vadd.f32 %v960, %v1051
  %v1054 = vxor.u32 %v1053, 2147483648
  %v1055 = vmul.f32 %v1054, 1.442695
  %v1056 = vpow.pop %v1055
  %v1057 = vadd.f32 %v1056, 1.0
  %v1058 = vrcp.pop %v1057
  %v1059 = vmul.f32 1.0, %v1058
  %v1060 = vadd.f32 %v1003, %v75
  %1062 = vrot.lane.b32.xlu0 %v1060, 96
  %v1063 = vpop.permute.xlu0 %1062
  %v1065 = vmul.f32 %v1048, %v1063
  %1067 = vrot.lane.b32.xlu0 %v1065, 64
  %v1068 = vpop.permute.xlu0 %1067
  %v1070 = vadd.f32 %v960, %v1068
  %v1071 = vtanh.pop %v1070
  %v1072 = vsub.f32 1.0, %v1059
  %1074 = vrot.lane.b32.xlu0 %v1071, 96
  %v1075 = vpop.permute.xlu0 %1074
  %v1077 = vmul.f32 %v1072, %v1075
  %v1078 = vmul.f32 %v1059, %v961
  %v1079 = vadd.f32 %v1077, %v1078
  %1081 = vrot.lane.b32.xlu0 %v1037, 96
  %v1082 = vpop.permute.xlu0 %1081
  %1084 = vst.msk [vmem:[#allocation2] sm:$0xff] %vm249, %v1082
  %1085 = vst.msk [vmem:[#allocation2] sm:$0xff] %vm251, %v1079
  %s1086 = scalar_lea.vmem %s4, 48
  %1087 = vst.msk [vmem:[%s1086] sm:$0xff] %vm249, %v1082
  %1089 = vrot.lane.b32.xlu0 %v1079, 96
  %v1090 = vpop.permute.xlu0 %1089
  %s1092 = scalar_lea.vmem %s52, 8
  %1093 = vst.msk [vmem:[%s1092] sm:$0xff] %vm249, %v1090
  %s1094 = scalar_lea.vmem %s0, 28
  %v1095 = vld [vmem:[%s1094] sm:$0xf]
  %v1096 = vunpack.c.l.bf16 %v1095
  %v1097 = vld [vmem:[%s44] sm:$0xf]
  %v1098 = vunpack.c.l.bf16 %v1097
  %v1099 = vld [vmem:[#allocation2] sm:$0xff]
  %v1100 = vpack.c.bf16 %v1099, %v1099
  %v1102 = vsel %vm124, %v1100, 0
  %1104 = vmatprep.subr.bf16.mxu0 %v109
  %1105 = vmatpush1.bf16.msra.mxu0 %v108
  %1106 = vmatprep.subr.bf16.mxu0 %v111
  %1107 = vmatpush1.bf16.msra.mxu0 %v110
  %1108 = vmatprep.subr.bf16.mxu0 %v113
  %1109 = vmatpush1.bf16.msra.mxu0 %v112
  %1110 = vmatprep.subr.bf16.mxu0 %v115
  %1111 = vmatpush1.bf16.msra.mxu0 %v114
  %1112 = vmatprep.subr.bf16.mxu0 0
  %1113 = vmatpush1.bf16.msra.mxu0 0
  %1114 = vmatprep.subr.bf16.mxu0 0
  %1115 = vmatpush1.bf16.msra.mxu0 0
  %1116 = vmatprep.subr.bf16.mxu0 0
  %1117 = vmatpush1.bf16.msra.mxu0 0
  %1118 = vmatprep.subr.bf16.mxu0 0
  %1119 = vmatpush1.bf16.msra.mxu0 0
  %1120 = vmatprep.subr.bf16.mxu0 0
  %1121 = vmatpush1.bf16.msra.mxu0 0
  %1122 = vmatprep.subr.bf16.mxu0 0
  %1123 = vmatpush1.bf16.msra.mxu0 0
  %1124 = vmatprep.subr.bf16.mxu0 0
  %1125 = vmatpush1.bf16.msra.mxu0 0
  %1126 = vmatprep.subr.bf16.mxu0 0
  %1127 = vmatpush1.bf16.msra.mxu0 0
  %1128 = vmatprep.subr.bf16.mxu0 0
  %1129 = vmatpush1.bf16.msra.mxu0 0
  %1130 = vmatprep.subr.bf16.mxu0 0
  %1131 = vmatpush1.bf16.msra.mxu0 0
  %1132 = vmatprep.subr.bf16.mxu0 0
  %1133 = vmatpush1.bf16.msra.mxu0 0
  %1134 = vmatprep.subr.bf16.mxu0 0
  %1135 = vmatpush1.bf16.msra.mxu0 0
  %1136 = vmatprep.mubr.bf16.mxu0 0
  %1137 = vmatmul.mubr.bf16.gmra.mrb[0].mxu0 %v1102
  %v1138 = vpop.f32.mrb[0].mxu0
  %v1139 = vadd.f32 0.0, %v1138
  %v1140 = vpop.f32.mrb[0].mxu0
  %v1141 = vadd.f32 0.0, %v1140
  %v1142 = vpop.f32.mrb[0].mxu0
  %v1143 = vpop.f32.mrb[0].mxu0
  %1144 = vdwg.mxu0
  %v1145 = vadd.f32 %v1096, %v1139
  %v1146 = vxor.u32 %v1145, 2147483648
  %v1147 = vmul.f32 %v1146, 1.442695
  %v1148 = vpow.pop %v1147
  %v1149 = vadd.f32 %v1148, 1.0
  %v1150 = vrcp.pop %v1149
  %v1151 = vmul.f32 1.0, %v1150
  %v1152 = vadd.f32 %v1139, %v177
  %1154 = vrot.lane.b32.xlu0 %v1152, 64
  %v1155 = vpop.permute.xlu0 %1154
  %v1157 = vmul.f32 %v1151, %v1155
  %1159 = vrot.lane.b32.xlu0 %v1157, 64
  %v1160 = vpop.permute.xlu0 %1159
  %v1162 = vadd.f32 %v1096, %v1160
  %v1163 = vtanh.pop %v1162
  %v1164 = vsub.f32 1.0, %v1151
  %1166 = vrot.lane.b32.xlu0 %v1163, 96
  %v1167 = vpop.permute.xlu0 %1166
  %v1169 = vmul.f32 %v1164, %v1167
  %1171 = vrot.lane.b32.xlu0 %v1099, 32
  %v1172 = vpop.permute.xlu0 %1171
  %v1174 = vmul.f32 %v1151, %v1172
  %v1175 = vadd.f32 %v1169, %v1174
  %1177 = vrot.lane.b32.xlu0 %v1139, 32
  %v1178 = vpop.permute.xlu0 %1177
  %v1180 = vadd.f32 %v1098, %v1178
  %v1181 = vxor.u32 %v1180, 2147483648
  %v1182 = vmul.f32 %v1181, 1.442695
  %v1183 = vpow.pop %v1182
  %v1184 = vadd.f32 %v1183, 1.0
  %v1185 = vrcp.pop %v1184
  %v1186 = vmul.f32 1.0, %v1185
  %1188 = vrot.lane.b32.xlu0 %v1141, 32
  %v1189 = vpop.permute.xlu0 %1188
  %v1191 = vadd.f32 %v1098, %v1189
  %v1192 = vxor.u32 %v1191, 2147483648
  %v1193 = vmul.f32 %v1192, 1.442695
  %v1194 = vpow.pop %v1193
  %v1195 = vadd.f32 %v1194, 1.0
  %v1196 = vrcp.pop %v1195
  %v1197 = vmul.f32 1.0, %v1196
  %v1198 = vadd.f32 %v1141, %v75
  %1200 = vrot.lane.b32.xlu0 %v1198, 96
  %v1201 = vpop.permute.xlu0 %1200
  %v1203 = vmul.f32 %v1186, %v1201
  %1205 = vrot.lane.b32.xlu0 %v1203, 64
  %v1206 = vpop.permute.xlu0 %1205
  %v1208 = vadd.f32 %v1098, %v1206
  %v1209 = vtanh.pop %v1208
  %v1210 = vsub.f32 1.0, %v1197
  %1212 = vrot.lane.b32.xlu0 %v1209, 96
  %v1213 = vpop.permute.xlu0 %1212
  %v1215 = vmul.f32 %v1210, %v1213
  %v1216 = vmul.f32 %v1197, %v1099
  %v1217 = vadd.f32 %v1215, %v1216
  %1219 = vrot.lane.b32.xlu0 %v1175, 96
  %v1220 = vpop.permute.xlu0 %1219
  %1222 = vst.msk [vmem:[#allocation2] sm:$0xff] %vm249, %v1220
  %1223 = vst.msk [vmem:[#allocation2] sm:$0xff] %vm251, %v1217
  %s1224 = scalar_lea.vmem %s4, 56
  %1225 = vst.msk [vmem:[%s1224] sm:$0xff] %vm249, %v1220
  %1227 = vrot.lane.b32.xlu0 %v1217, 96
  %v1228 = vpop.permute.xlu0 %1227
  %1230 = vst.msk [vmem:[%s52] sm:$0xff] %vm249, %v1228
  %s1231 = ssub.s32 0, 0
  %s1232 = smul.u32 8, %s1231
  %p1233 = scmp.lt.s32.totalorder %s1232, 7
  %s1234 = scalar_select %p1233, %s1232, 7
  %s1235 = smul.addr %s1234, 8
  %s1236 = scalar_lea.vmem %s5, %s1235
  // Predicated region
  $region22: #{bidirectional_gru.2} parent=0 // pred_check
    _
  $region23: #{bidirectional_gru.2} parent=0 // pred_check_branch
    %1238 = sbr.rel (0) target = $region25
  $region24: #{bidirectional_gru.2} parent=0 // pred_region
    _
  $region25: #{bidirectional_gru.2} parent=0 // pred_fallthru
    _
  // Predicated region
  $region26: #{bidirectional_gru.2} parent=0 // pred_check
    _
  $region27: #{bidirectional_gru.2} parent=0 // pred_check_branch
    %1240 = sbr.rel (0) target = $region29
  $region28: #{bidirectional_gru.2} parent=0 // pred_region
    %s1241 = ssub.s32 0, 0
    %s1242 = smul.u32 8, %s1241
  $region29: #{bidirectional_gru.2} parent=0 // pred_fallthru
    _
  // Predicated region
  $region30: #{bidirectional_gru.2} parent=0 // pred_check
    _
  $region31: #{bidirectional_gru.2} parent=0 // pred_check_branch
    %1244 = sbr.rel (0) target = $region33
  $region32: #{bidirectional_gru.2} parent=0 // pred_region
    _
  $region33: #{bidirectional_gru.2} parent=0 // pred_fallthru
    _
  // Predicated region
  $region34: #{bidirectional_gru.2} parent=0 // pred_check
    _
  $region35: #{bidirectional_gru.2} parent=0 // pred_check_branch
    %1246 = sbr.rel (0) target = $region37
  $region36: #{bidirectional_gru.2} parent=0 // pred_region
    %s1247 = ssub.s32 0, 0
    %s1248 = smul.u32 8, %s1247
    %p1249 = scmp.lt.s32.totalorder %s1248, 7
    %s1250 = scalar_select %p1249, %s1248, 7
    %s1251 = smul.addr %s1250, 8
    %s1252 = scalar_lea.vmem %s5, %s1251
  $region37: #{bidirectional_gru.2} parent=0 // pred_fallthru
    _

</llo_original>
